<compile_context>
chip_gen: v6e
topology: v6e:2x2x1
jax: 0.10.0
libtpu: 0.0.40
codegen_flags: <defaults>
</compile_context>

<pallas_src>
import functools

import jax
import jax.numpy as jnp
from jax.experimental import pallas as pl
from jax.experimental.pallas import tpu as pltpu

EPS = 1e-5


def _choose_lane_tile(l_pad, c, ks):
    """Largest 128-multiple lane tile dividing l_pad that fits a VMEM budget."""
    budget = 24 * 1024 * 1024   # stay well under the ~32 MiB scoped default (v7x-safe)
    for t in (2048, 1024, 512, 256, 128):
        if l_pad % t == 0 and 4 * t * (2 * c * ks + 4 * c) <= budget:
            return t
    return 128


# ----------------------------------------------------------------------------
# Kernel 1: attention + depthwise conv + BN partial statistics.
# ----------------------------------------------------------------------------
def _encoder_kernel(xe_ref, wa_avg_ref, wa_max_ref, ba_ref, wd_ref, bd_ref,
                    z_ref, sum_ref, ssq_ref,
                    *, lane_tile, l_valid, need_mask):
    # xe_ref    : (1, C, KS, L_T) gathered neighbourhoods for one (b, l-tile)
    # wa_*_ref  : (KS, KS) attention conv weights (mean part / max part)
    # ba_ref    : (KS, 1)  attention conv bias
    # wd_ref    : (C, KS)  depthwise conv weights; bd_ref: (C, 1) bias
    # z_ref     : (1, C, L_T) pre-norm activation slab of (B, C, L_pad)
    # sum_ref/ssq_ref : (1, C, 1) per-batch BN partials (revisited across l)
    l = pl.program_id(1)

    xe = xe_ref[0]                                   # (C, KS, L_T)
    c, ks, _ = xe.shape

    # --- SpatialAttentionModule_v1 ----------------------------------------
    avg = jnp.sum(xe, axis=0) * (1.0 / c)            # (KS, L_T) channel mean
    mx = jnp.max(xe, axis=0)                         # (KS, L_T) channel max
    att = (jnp.dot(wa_avg_ref[...], avg, preferred_element_type=jnp.float32)
           + jnp.dot(wa_max_ref[...], mx, preferred_element_type=jnp.float32)
           + ba_ref[...])                            # (KS, L_T)
    u = 1.0 + jax.nn.sigmoid(att)                    # residual: att*x + x

    # --- depthwise Conv2d(C, C, (1, KS), groups=C): unrolled VPU FMAs ------
    wd = wd_ref[...]                                 # (C, KS)
    acc = bd_ref[...] + wd[:, 0:1] * (xe_ref[0, :, 0, :] * u[0:1, :])
    for k in range(1, ks):
        acc = acc + wd[:, k:k + 1] * (xe_ref[0, :, k, :] * u[k:k + 1, :])

    z_ref[0] = acc                                   # lane-dense (C, L_T)

    # --- BatchNorm partial statistics (accumulated across l-tiles) ---------
    @pl.when(l == 0)
    def _():
        sum_ref[...] = jnp.zeros_like(sum_ref)
        ssq_ref[...] = jnp.zeros_like(ssq_ref)

    if need_mask:
        lane = jax.lax.broadcasted_iota(jnp.int32, acc.shape, 1) + l * lane_tile
        acc_m = jnp.where(lane < l_valid, acc, 0.0)
    else:
        acc_m = acc
    sum_ref[0] += jnp.sum(acc_m, axis=-1, keepdims=True)
    ssq_ref[0] += jnp.sum(acc_m * acc, axis=-1, keepdims=True)


# ----------------------------------------------------------------------------
# Kernel 2: BatchNorm apply (precomputed scale/shift) + Swish, elementwise.
# ----------------------------------------------------------------------------
def _bn_swish_kernel(z_ref, scale_ref, shift_ref, out_ref):
    # z_ref: (1, C, L_T) of (B, C, L_pad); out_ref: same layout.
    y = z_ref[0] * scale_ref[...] + shift_ref[...]
    out_ref[0] = y * jax.nn.sigmoid(y)               # Swish


# ----------------------------------------------------------------------------
# Wrapper
# ----------------------------------------------------------------------------
@functools.partial(jax.jit, static_argnames=("q", "hh", "ww"))
def encoder_v2_forward(x, idx, wa_avg, wa_max, ba, wd, bd, gamma, beta,
                       *, q=10, hh=4, ww=4):
    B, C, H, W = x.shape
    L, KS = idx.shape

    l_pad = ((L + 127) // 128) * 128
    lane_tile = _choose_lane_tile(l_pad, C, KS)
    n_l = l_pad // lane_tile

    # Gather directly into (B, C, KS, L_pad): transpose/pad the tiny index
    # table instead of the big activation.
    xf = x.reshape(B, C, H * W).astype(jnp.float32)
    idx_t = jnp.pad(idx.T, ((0, 0), (0, l_pad - L)))           # (KS, L_pad)
    xe = jnp.take(xf, idx_t.reshape(-1), axis=2).reshape(B, C, KS, l_pad)

    kernel1 = functools.partial(_encoder_kernel, lane_tile=lane_tile,
                                l_valid=L, need_mask=(l_pad != L))

    z, sums, ssqs = pl.pallas_call(
        kernel1,
        out_shape=(
            jax.ShapeDtypeStruct((B, C, l_pad), jnp.float32),   # pre-norm act
            jax.ShapeDtypeStruct((B, C, 1), jnp.float32),       # partial sums
            jax.ShapeDtypeStruct((B, C, 1), jnp.float32),       # partial sumsq
        ),
        grid_spec=pltpu.PrefetchScalarGridSpec(
            num_scalar_prefetch=0,
            grid=(B, n_l),
            in_specs=[
                pl.BlockSpec((1, C, KS, lane_tile), lambda b, l: (b, 0, 0, l)),
                pl.BlockSpec((KS, KS), lambda b, l: (0, 0)),
                pl.BlockSpec((KS, KS), lambda b, l: (0, 0)),
                pl.BlockSpec((KS, 1), lambda b, l: (0, 0)),
                pl.BlockSpec((C, KS), lambda b, l: (0, 0)),
                pl.BlockSpec((C, 1), lambda b, l: (0, 0)),
            ],
            out_specs=(
                pl.BlockSpec((1, C, lane_tile), lambda b, l: (b, 0, l)),
                pl.BlockSpec((1, C, 1), lambda b, l: (b, 0, 0)),
                pl.BlockSpec((1, C, 1), lambda b, l: (b, 0, 0)),
            ),
        ),
        compiler_params=pltpu.CompilerParams(
            dimension_semantics=("parallel", "arbitrary")),
    )(xe, wa_avg, wa_max, ba.reshape(KS, 1), wd, bd.reshape(C, 1))

    # Training-mode BatchNorm: batch statistics over (B, L) per channel.
    n = B * L
    s = jnp.sum(sums[:, :, 0], axis=0)                          # (C,)
    ss = jnp.sum(ssqs[:, :, 0], axis=0)                         # (C,)
    mean = s / n
    var = jnp.maximum(ss / n - mean * mean, 0.0)                # biased, as BN
    inv = jax.lax.rsqrt(var + EPS)
    scale = (gamma * inv).reshape(C, 1)
    shift = (beta - mean * gamma * inv).reshape(C, 1)

    y = pl.pallas_call(
        _bn_swish_kernel,
        out_shape=jax.ShapeDtypeStruct((B, C, l_pad), jnp.float32),
        grid_spec=pltpu.PrefetchScalarGridSpec(
            num_scalar_prefetch=0,
            grid=(B, n_l),
            in_specs=[
                pl.BlockSpec((1, C, lane_tile), lambda b, l: (b, 0, l)),
                pl.BlockSpec((C, 1), lambda b, l: (0, 0)),
                pl.BlockSpec((C, 1), lambda b, l: (0, 0)),
            ],
            out_specs=pl.BlockSpec((1, C, lane_tile), lambda b, l: (b, 0, l)),
        ),
        compiler_params=pltpu.CompilerParams(
            dimension_semantics=("parallel", "parallel")),
    )(z, scale, shift)

    # Drop lane padding, then 'b c (q h w) -> (b q) c h w' (small transpose).
    y = y[:, :, :L]
    y = (y.reshape(B, C, q, hh, ww)
          .transpose(0, 2, 1, 3, 4)
          .reshape(B * q, C, hh, ww))
    return y


# ----------------------------------------------------------------------------
# Pure-JAX reference (mirrors the PyTorch forward) for verification.
# ----------------------------------------------------------------------------
def reference_forward(x, idx, wa_avg, wa_max, ba, wd, bd, gamma, beta,
                      q=10, hh=4, ww=4):
    B, C, H, W = x.shape
    L, KS = idx.shape
    xf = x.reshape(B, C, H * W)
    xe = xf[:, :, idx]                                        # (B, C, L, KS)
    avg = jnp.mean(xe, axis=1)                                # (B, L, KS)
    mx = jnp.max(xe, axis=1)                                  # (B, L, KS)
    att = (jnp.einsum('jk,blk->bjl', wa_avg, avg)
           + jnp.einsum('jk,blk->bjl', wa_max, mx)
           + ba[None, :, None])                               # (B, KS, L)
    att = jax.nn.sigmoid(att)
    att = jnp.transpose(att, (0, 2, 1))[:, None]              # (B, 1, L, KS)
    y = att * xe + xe
    out = jnp.einsum('ck,bclk->bcl', wd, y) + bd[None, :, None]   # (B, C, L)
    mean = jnp.mean(out, axis=(0, 2), keepdims=True)
    var = jnp.mean((out - mean) ** 2, axis=(0, 2), keepdims=True)
    z = (out - mean) * jax.lax.rsqrt(var + EPS)
    z = z * gamma[None, :, None] + beta[None, :, None]
    z = z * jax.nn.sigmoid(z)
    return (z.reshape(B, C, q, hh, ww)
             .transpose(0, 2, 1, 3, 4)
             .reshape(B * q, C, hh, ww))


if __name__ == "__main__":
    # Small, module-consistent shapes:
    #   in_channels=4, kernel_size=9, dggrid_level=2 -> maxij=4, L = 10*4*4=160
    B, C, H, W = 2, 4, 16, 16
    KS = 9
    dggrid_level = 2
    maxij = 2 ** dggrid_level
    L = 10 * maxij * maxij

    key = jax.random.PRNGKey(0)
    kx, ki, k1, k2, k3, k4, k5 = jax.random.split(key, 7)

    x = jax.random.normal(kx, (B, C, H, W), dtype=jnp.float32)

    # TODO(synk): get_erp2ico_knn reads a DGGRID lookup table from disk; use
    # deterministic synthetic ERP->ico KNN indices instead.
    idx = jax.random.randint(ki, (L, KS), 0, H * W, dtype=jnp.int32)

    # SpatialAttentionModule_v1 conv: Conv2d(2, KS, (1, KS)) -> split weight
    # into the part applied to the channel-mean and the channel-max maps.
    wa_avg = 0.1 * jax.random.normal(k1, (KS, KS), dtype=jnp.float32)
    wa_max = 0.1 * jax.random.normal(k2, (KS, KS), dtype=jnp.float32)
    ba = 0.1 * jax.random.normal(k3, (KS,), dtype=jnp.float32)

    # depth_conv: Conv2d(C, C, (1, KS), groups=C) -> weight (C, KS), bias (C,)
    wd = 0.1 * jax.random.normal(k4, (C, KS), dtype=jnp.float32)
    bd = 0.1 * jax.random.normal(k5, (C,), dtype=jnp.float32)

    # BatchNorm affine params (PyTorch default init: gamma=1, beta=0).
    gamma = jnp.ones((C,), dtype=jnp.float32)
    beta = jnp.zeros((C,), dtype=jnp.float32)

    out = encoder_v2_forward(x, idx, wa_avg, wa_max, ba, wd, bd, gamma, beta,
                             q=10, hh=maxij, ww=maxij)
    out = jax.block_until_ready(out)

    ref = reference_forward(x, idx, wa_avg, wa_max, ba, wd, bd, gamma, beta,
                            q=10, hh=maxij, ww=maxij)

    assert out.shape == (B * 10, C, maxij, maxij), out.shape
    assert jnp.allclose(out, ref, rtol=1e-3, atol=1e-3), (
        float(jnp.max(jnp.abs(out - ref))))
    print("KERNEL_OK")
</pallas_src>

<mosaic_0001>
module attributes {stable_mosaic.version = 11 : i64} {
  func.func @_encoder_kernel(%arg0: i32, %arg1: i32, %arg2: memref<1x4x9x256xf32, #tpu.memory_space<vmem>>, %arg3: memref<9x9xf32, #tpu.memory_space<vmem>>, %arg4: memref<9x9xf32, #tpu.memory_space<vmem>>, %arg5: memref<9x1xf32, #tpu.memory_space<vmem>>, %arg6: memref<4x9xf32, #tpu.memory_space<vmem>>, %arg7: memref<4x1xf32, #tpu.memory_space<vmem>>, %arg8: memref<1x4x256xf32, #tpu.memory_space<vmem>>, %arg9: memref<1x4x1xf32, #tpu.memory_space<vmem>>, %arg10: memref<1x4x1xf32, #tpu.memory_space<vmem>>) attributes {dimension_semantics = [#tpu.dimension_semantics<parallel>, #tpu.dimension_semantics<arbitrary>], iteration_bounds = array<i64: 2, 1>, scalar_prefetch = 0 : i64, scratch_operands = 0 : i64, tpu.core_type = #tpu.core_type<tc>, window_params = [{transform_indices = @transform_0, window_bounds = array<i64: 1, 4, 9, 256>}, {pipeline_mode = #tpu.pipeline_mode<synchronous>, transform_indices = @transform_1, window_bounds = array<i64: 9, 9>}, {pipeline_mode = #tpu.pipeline_mode<synchronous>, transform_indices = @transform_2, window_bounds = array<i64: 9, 9>}, {pipeline_mode = #tpu.pipeline_mode<synchronous>, transform_indices = @transform_3, window_bounds = array<i64: 9, 1>}, {pipeline_mode = #tpu.pipeline_mode<synchronous>, transform_indices = @transform_4, window_bounds = array<i64: 4, 9>}, {pipeline_mode = #tpu.pipeline_mode<synchronous>, transform_indices = @transform_5, window_bounds = array<i64: 4, 1>}, {transform_indices = @transform_6, window_bounds = array<i64: 1, 4, 256>}, {transform_indices = @transform_7, window_bounds = array<i64: 1, 4, 1>}, {transform_indices = @transform_8, window_bounds = array<i64: 1, 4, 1>}]} {
    %c0 = arith.constant 0 : index
    %c0_0 = arith.constant 0 : index
    %c0_1 = arith.constant 0 : index
    %c0_2 = arith.constant 0 : index
    %0 = vector.load %arg2[%c0, %c0_0, %c0_1, %c0_2] : memref<1x4x9x256xf32, #tpu.memory_space<vmem>>, vector<1x4x9x256xf32>
    %1 = vector.shape_cast %0 : vector<1x4x9x256xf32> to vector<4x9x256xf32>
    %cst = arith.constant dense<0.000000e+00> : vector<9x256xf32>
    %2 = vector.multi_reduction <add>, %1, %cst [0] : vector<4x9x256xf32> to vector<9x256xf32>
    %cst_3 = arith.constant 2.500000e-01 : f32
    %3 = vector.broadcast %cst_3 : f32 to vector<9x256xf32>
    %4 = arith.mulf %2, %3 : vector<9x256xf32>
    %cst_4 = arith.constant dense<0xFF800000> : vector<9x256xf32>
    %5 = vector.multi_reduction <maximumf>, %1, %cst_4 [0] : vector<4x9x256xf32> to vector<9x256xf32>
    %c0_5 = arith.constant 0 : index
    %c0_6 = arith.constant 0 : index
    %6 = vector.load %arg3[%c0_5, %c0_6] : memref<9x9xf32, #tpu.memory_space<vmem>>, vector<9x9xf32>
    %cst_7 = arith.constant dense<0.000000e+00> : vector<9x256xf32>
    %7 = tpu.matmul %6, %4, %cst_7 {dimension_numbers = #tpu.dot_dimension_numbers<[1], [0], [0], [1], [0, 0, 1, 1], [], []>} : vector<9x9xf32>, vector<9x256xf32>, vector<9x256xf32> -> vector<9x256xf32>
    %c0_8 = arith.constant 0 : index
    %c0_9 = arith.constant 0 : index
    %8 = vector.load %arg4[%c0_8, %c0_9] : memref<9x9xf32, #tpu.memory_space<vmem>>, vector<9x9xf32>
    %cst_10 = arith.constant dense<0.000000e+00> : vector<9x256xf32>
    %9 = tpu.matmul %8, %5, %cst_10 {dimension_numbers = #tpu.dot_dimension_numbers<[1], [0], [0], [1], [0, 0, 1, 1], [], []>} : vector<9x9xf32>, vector<9x256xf32>, vector<9x256xf32> -> vector<9x256xf32>
    %10 = arith.addf %7, %9 : vector<9x256xf32>
    %c0_11 = arith.constant 0 : index
    %c0_12 = arith.constant 0 : index
    %11 = vector.load %arg5[%c0_11, %c0_12] : memref<9x1xf32, #tpu.memory_space<vmem>>, vector<9x1xf32>
    %12 = vector.broadcast %11 : vector<9x1xf32> to vector<9x256xf32>
    %13 = arith.addf %10, %12 : vector<9x256xf32>
    %14 = arith.negf %13 : vector<9x256xf32>
    %15 = math.exp %14 : vector<9x256xf32>
    %cst_13 = arith.constant 1.000000e+00 : f32
    %16 = vector.broadcast %cst_13 : f32 to vector<9x256xf32>
    %17 = arith.addf %16, %15 : vector<9x256xf32>
    %18 = arith.divf %16, %17 : vector<9x256xf32>
    %cst_14 = arith.constant 1.000000e+00 : f32
    %19 = vector.broadcast %cst_14 : f32 to vector<9x256xf32>
    %20 = arith.addf %19, %18 : vector<9x256xf32>
    %c0_15 = arith.constant 0 : index
    %c0_16 = arith.constant 0 : index
    %21 = vector.load %arg6[%c0_15, %c0_16] : memref<4x9xf32, #tpu.memory_space<vmem>>, vector<4x9xf32>
    %c0_17 = arith.constant 0 : index
    %c0_18 = arith.constant 0 : index
    %22 = vector.load %arg7[%c0_17, %c0_18] : memref<4x1xf32, #tpu.memory_space<vmem>>, vector<4x1xf32>
    %23 = vector.extract_strided_slice %21 {offsets = [0, 0], sizes = [4, 1], strides = [1, 1]} : vector<4x9xf32> to vector<4x1xf32>
    %c0_19 = arith.constant 0 : index
    %c0_20 = arith.constant 0 : index
    %c0_21 = arith.constant 0 : index
    %c0_22 = arith.constant 0 : index
    %24 = vector.load %arg2[%c0_19, %c0_20, %c0_21, %c0_22] : memref<1x4x9x256xf32, #tpu.memory_space<vmem>>, vector<1x4x1x256xf32>
    %25 = vector.shape_cast %24 : vector<1x4x1x256xf32> to vector<4x256xf32>
    %26 = vector.extract_strided_slice %20 {offsets = [0, 0], sizes = [1, 256], strides = [1, 1]} : vector<9x256xf32> to vector<1x256xf32>
    %27 = vector.broadcast %26 : vector<1x256xf32> to vector<4x256xf32>
    %28 = arith.mulf %25, %27 : vector<4x256xf32>
    %29 = vector.broadcast %23 : vector<4x1xf32> to vector<4x256xf32>
    %30 = arith.mulf %29, %28 : vector<4x256xf32>
    %31 = vector.broadcast %22 : vector<4x1xf32> to vector<4x256xf32>
    %32 = arith.addf %31, %30 : vector<4x256xf32>
    %33 = vector.extract_strided_slice %21 {offsets = [0, 1], sizes = [4, 1], strides = [1, 1]} : vector<4x9xf32> to vector<4x1xf32>
    %c0_23 = arith.constant 0 : index
    %c0_24 = arith.constant 0 : index
    %c1 = arith.constant 1 : index
    %c0_25 = arith.constant 0 : index
    %34 = vector.load %arg2[%c0_23, %c0_24, %c1, %c0_25] : memref<1x4x9x256xf32, #tpu.memory_space<vmem>>, vector<1x4x1x256xf32>
    %35 = vector.shape_cast %34 : vector<1x4x1x256xf32> to vector<4x256xf32>
    %36 = vector.extract_strided_slice %20 {offsets = [1, 0], sizes = [1, 256], strides = [1, 1]} : vector<9x256xf32> to vector<1x256xf32>
    %37 = vector.broadcast %36 : vector<1x256xf32> to vector<4x256xf32>
    %38 = arith.mulf %35, %37 : vector<4x256xf32>
    %39 = vector.broadcast %33 : vector<4x1xf32> to vector<4x256xf32>
    %40 = arith.mulf %39, %38 : vector<4x256xf32>
    %41 = arith.addf %32, %40 : vector<4x256xf32>
    %42 = vector.extract_strided_slice %21 {offsets = [0, 2], sizes = [4, 1], strides = [1, 1]} : vector<4x9xf32> to vector<4x1xf32>
    %c0_26 = arith.constant 0 : index
    %c0_27 = arith.constant 0 : index
    %c2 = arith.constant 2 : index
    %c0_28 = arith.constant 0 : index
    %43 = vector.load %arg2[%c0_26, %c0_27, %c2, %c0_28] : memref<1x4x9x256xf32, #tpu.memory_space<vmem>>, vector<1x4x1x256xf32>
    %44 = vector.shape_cast %43 : vector<1x4x1x256xf32> to vector<4x256xf32>
    %45 = vector.extract_strided_slice %20 {offsets = [2, 0], sizes = [1, 256], strides = [1, 1]} : vector<9x256xf32> to vector<1x256xf32>
    %46 = vector.broadcast %45 : vector<1x256xf32> to vector<4x256xf32>
    %47 = arith.mulf %44, %46 : vector<4x256xf32>
    %48 = vector.broadcast %42 : vector<4x1xf32> to vector<4x256xf32>
    %49 = arith.mulf %48, %47 : vector<4x256xf32>
    %50 = arith.addf %41, %49 : vector<4x256xf32>
    %51 = vector.extract_strided_slice %21 {offsets = [0, 3], sizes = [4, 1], strides = [1, 1]} : vector<4x9xf32> to vector<4x1xf32>
    %c0_29 = arith.constant 0 : index
    %c0_30 = arith.constant 0 : index
    %c3 = arith.constant 3 : index
    %c0_31 = arith.constant 0 : index
    %52 = vector.load %arg2[%c0_29, %c0_30, %c3, %c0_31] : memref<1x4x9x256xf32, #tpu.memory_space<vmem>>, vector<1x4x1x256xf32>
    %53 = vector.shape_cast %52 : vector<1x4x1x256xf32> to vector<4x256xf32>
    %54 = vector.extract_strided_slice %20 {offsets = [3, 0], sizes = [1, 256], strides = [1, 1]} : vector<9x256xf32> to vector<1x256xf32>
    %55 = vector.broadcast %54 : vector<1x256xf32> to vector<4x256xf32>
    %56 = arith.mulf %53, %55 : vector<4x256xf32>
    %57 = vector.broadcast %51 : vector<4x1xf32> to vector<4x256xf32>
    %58 = arith.mulf %57, %56 : vector<4x256xf32>
    %59 = arith.addf %50, %58 : vector<4x256xf32>
    %60 = vector.extract_strided_slice %21 {offsets = [0, 4], sizes = [4, 1], strides = [1, 1]} : vector<4x9xf32> to vector<4x1xf32>
    %c0_32 = arith.constant 0 : index
    %c0_33 = arith.constant 0 : index
    %c4 = arith.constant 4 : index
    %c0_34 = arith.constant 0 : index
    %61 = vector.load %arg2[%c0_32, %c0_33, %c4, %c0_34] : memref<1x4x9x256xf32, #tpu.memory_space<vmem>>, vector<1x4x1x256xf32>
    %62 = vector.shape_cast %61 : vector<1x4x1x256xf32> to vector<4x256xf32>
    %63 = vector.extract_strided_slice %20 {offsets = [4, 0], sizes = [1, 256], strides = [1, 1]} : vector<9x256xf32> to vector<1x256xf32>
    %64 = vector.broadcast %63 : vector<1x256xf32> to vector<4x256xf32>
    %65 = arith.mulf %62, %64 : vector<4x256xf32>
    %66 = vector.broadcast %60 : vector<4x1xf32> to vector<4x256xf32>
    %67 = arith.mulf %66, %65 : vector<4x256xf32>
    %68 = arith.addf %59, %67 : vector<4x256xf32>
    %69 = vector.extract_strided_slice %21 {offsets = [0, 5], sizes = [4, 1], strides = [1, 1]} : vector<4x9xf32> to vector<4x1xf32>
    %c0_35 = arith.constant 0 : index
    %c0_36 = arith.constant 0 : index
    %c5 = arith.constant 5 : index
    %c0_37 = arith.constant 0 : index
    %70 = vector.load %arg2[%c0_35, %c0_36, %c5, %c0_37] : memref<1x4x9x256xf32, #tpu.memory_space<vmem>>, vector<1x4x1x256xf32>
    %71 = vector.shape_cast %70 : vector<1x4x1x256xf32> to vector<4x256xf32>
    %72 = vector.extract_strided_slice %20 {offsets = [5, 0], sizes = [1, 256], strides = [1, 1]} : vector<9x256xf32> to vector<1x256xf32>
    %73 = vector.broadcast %72 : vector<1x256xf32> to vector<4x256xf32>
    %74 = arith.mulf %71, %73 : vector<4x256xf32>
    %75 = vector.broadcast %69 : vector<4x1xf32> to vector<4x256xf32>
    %76 = arith.mulf %75, %74 : vector<4x256xf32>
    %77 = arith.addf %68, %76 : vector<4x256xf32>
    %78 = vector.extract_strided_slice %21 {offsets = [0, 6], sizes = [4, 1], strides = [1, 1]} : vector<4x9xf32> to vector<4x1xf32>
    %c0_38 = arith.constant 0 : index
    %c0_39 = arith.constant 0 : index
    %c6 = arith.constant 6 : index
    %c0_40 = arith.constant 0 : index
    %79 = vector.load %arg2[%c0_38, %c0_39, %c6, %c0_40] : memref<1x4x9x256xf32, #tpu.memory_space<vmem>>, vector<1x4x1x256xf32>
    %80 = vector.shape_cast %79 : vector<1x4x1x256xf32> to vector<4x256xf32>
    %81 = vector.extract_strided_slice %20 {offsets = [6, 0], sizes = [1, 256], strides = [1, 1]} : vector<9x256xf32> to vector<1x256xf32>
    %82 = vector.broadcast %81 : vector<1x256xf32> to vector<4x256xf32>
    %83 = arith.mulf %80, %82 : vector<4x256xf32>
    %84 = vector.broadcast %78 : vector<4x1xf32> to vector<4x256xf32>
    %85 = arith.mulf %84, %83 : vector<4x256xf32>
    %86 = arith.addf %77, %85 : vector<4x256xf32>
    %87 = vector.extract_strided_slice %21 {offsets = [0, 7], sizes = [4, 1], strides = [1, 1]} : vector<4x9xf32> to vector<4x1xf32>
    %c0_41 = arith.constant 0 : index
    %c0_42 = arith.constant 0 : index
    %c7 = arith.constant 7 : index
    %c0_43 = arith.constant 0 : index
    %88 = vector.load %arg2[%c0_41, %c0_42, %c7, %c0_43] : memref<1x4x9x256xf32, #tpu.memory_space<vmem>>, vector<1x4x1x256xf32>
    %89 = vector.shape_cast %88 : vector<1x4x1x256xf32> to vector<4x256xf32>
    %90 = vector.extract_strided_slice %20 {offsets = [7, 0], sizes = [1, 256], strides = [1, 1]} : vector<9x256xf32> to vector<1x256xf32>
    %91 = vector.broadcast %90 : vector<1x256xf32> to vector<4x256xf32>
    %92 = arith.mulf %89, %91 : vector<4x256xf32>
    %93 = vector.broadcast %87 : vector<4x1xf32> to vector<4x256xf32>
    %94 = arith.mulf %93, %92 : vector<4x256xf32>
    %95 = arith.addf %86, %94 : vector<4x256xf32>
    %96 = vector.extract_strided_slice %21 {offsets = [0, 8], sizes = [4, 1], strides = [1, 1]} : vector<4x9xf32> to vector<4x1xf32>
    %c0_44 = arith.constant 0 : index
    %c0_45 = arith.constant 0 : index
    %c8 = arith.constant 8 : index
    %c0_46 = arith.constant 0 : index
    %97 = vector.load %arg2[%c0_44, %c0_45, %c8, %c0_46] : memref<1x4x9x256xf32, #tpu.memory_space<vmem>>, vector<1x4x1x256xf32>
    %98 = vector.shape_cast %97 : vector<1x4x1x256xf32> to vector<4x256xf32>
    %99 = vector.extract_strided_slice %20 {offsets = [8, 0], sizes = [1, 256], strides = [1, 1]} : vector<9x256xf32> to vector<1x256xf32>
    %100 = vector.broadcast %99 : vector<1x256xf32> to vector<4x256xf32>
    %101 = arith.mulf %98, %100 : vector<4x256xf32>
    %102 = vector.broadcast %96 : vector<4x1xf32> to vector<4x256xf32>
    %103 = arith.mulf %102, %101 : vector<4x256xf32>
    %104 = arith.addf %95, %103 : vector<4x256xf32>
    %c0_47 = arith.constant 0 : index
    %c0_48 = arith.constant 0 : index
    %c0_49 = arith.constant 0 : index
    %105 = vector.load %arg8[%c0_47, %c0_48, %c0_49] : memref<1x4x256xf32, #tpu.memory_space<vmem>>, vector<1x4x256xf32>
    %106 = vector.shape_cast %105 : vector<1x4x256xf32> to vector<4x256xf32>
    %107 = vector.shape_cast %104 : vector<4x256xf32> to vector<1x4x256xf32>
    tpu.vector_store %arg8[%c0_47, %c0_48, %c0_49], %107 {strides = array<i32>} : memref<1x4x256xf32, #tpu.memory_space<vmem>>, vector<1x4x256xf32>,
    %c0_i32 = arith.constant 0 : i32
    %108 = arith.cmpi eq, %arg1, %c0_i32 : i32
    %109 = arith.extui %108 : i1 to i32
    %c0_i32_50 = arith.constant 0 : i32
    %110 = arith.cmpi ne, %109, %c0_i32_50 : i32
    scf.if %110 {
      %cst_66 = arith.constant 0.000000e+00 : f32
      %136 = vector.broadcast %cst_66 : f32 to vector<1x4x1xf32>
      %c0_67 = arith.constant 0 : index
      %c0_68 = arith.constant 0 : index
      %c0_69 = arith.constant 0 : index
      %137 = vector.load %arg9[%c0_67, %c0_68, %c0_69] : memref<1x4x1xf32, #tpu.memory_space<vmem>>, vector<1x4x1xf32>
      tpu.vector_store %arg9[%c0_67, %c0_68, %c0_69], %136 {strides = array<i32>} : memref<1x4x1xf32, #tpu.memory_space<vmem>>, vector<1x4x1xf32>,
      %cst_70 = arith.constant 0.000000e+00 : f32
      %138 = vector.broadcast %cst_70 : f32 to vector<1x4x1xf32>
      %c0_71 = arith.constant 0 : index
      %c0_72 = arith.constant 0 : index
      %c0_73 = arith.constant 0 : index
      %139 = vector.load %arg10[%c0_71, %c0_72, %c0_73] : memref<1x4x1xf32, #tpu.memory_space<vmem>>, vector<1x4x1xf32>
      tpu.vector_store %arg10[%c0_71, %c0_72, %c0_73], %138 {strides = array<i32>} : memref<1x4x1xf32, #tpu.memory_space<vmem>>, vector<1x4x1xf32>,
    } else {
    }
    %111 = tpu.iota {dimensions = array<i32: 1>} : vector<4x256xi32>
    %c256_i32 = arith.constant 256 : i32
    %112 = arith.muli %arg1, %c256_i32 : i32
    %113 = vector.broadcast %112 : i32 to vector<4x256xi32>
    %114 = arith.addi %111, %113 : vector<4x256xi32>
    %c160_i32 = arith.constant 160 : i32
    %115 = vector.broadcast %c160_i32 : i32 to vector<4x256xi32>
    %116 = arith.cmpi slt, %114, %115 : vector<4x256xi32>
    %cst_51 = arith.constant 0.000000e+00 : f32
    %117 = vector.broadcast %cst_51 : f32 to vector<4x256xf32>
    %118 = arith.select %116, %104, %117 : vector<4x256xi1>, vector<4x256xf32>
    %c0_52 = arith.constant 0 : index
    %c0_53 = arith.constant 0 : index
    %c0_54 = arith.constant 0 : index
    %119 = vector.load %arg9[%c0_52, %c0_53, %c0_54] : memref<1x4x1xf32, #tpu.memory_space<vmem>>, vector<1x4x1xf32>
    %120 = vector.shape_cast %119 : vector<1x4x1xf32> to vector<4x1xf32>
    %cst_55 = arith.constant dense<0.000000e+00> : vector<4xf32>
    %121 = vector.multi_reduction <add>, %118, %cst_55 [1] : vector<4x256xf32> to vector<4xf32>
    %122 = vector.shape_cast %121 : vector<4xf32> to vector<4x1xf32>
    %123 = arith.addf %120, %122 : vector<4x1xf32>
    %c0_56 = arith.constant 0 : index
    %c0_57 = arith.constant 0 : index
    %c0_58 = arith.constant 0 : index
    %124 = vector.load %arg9[%c0_56, %c0_57, %c0_58] : memref<1x4x1xf32, #tpu.memory_space<vmem>>, vector<1x4x1xf32>
    %125 = vector.shape_cast %124 : vector<1x4x1xf32> to vector<4x1xf32>
    %126 = vector.shape_cast %123 : vector<4x1xf32> to vector<1x4x1xf32>
    tpu.vector_store %arg9[%c0_56, %c0_57, %c0_58], %126 {strides = array<i32>} : memref<1x4x1xf32, #tpu.memory_space<vmem>>, vector<1x4x1xf32>,
    %c0_59 = arith.constant 0 : index
    %c0_60 = arith.constant 0 : index
    %c0_61 = arith.constant 0 : index
    %127 = vector.load %arg10[%c0_59, %c0_60, %c0_61] : memref<1x4x1xf32, #tpu.memory_space<vmem>>, vector<1x4x1xf32>
    %128 = vector.shape_cast %127 : vector<1x4x1xf32> to vector<4x1xf32>
    %129 = arith.mulf %118, %104 : vector<4x256xf32>
    %cst_62 = arith.constant dense<0.000000e+00> : vector<4xf32>
    %130 = vector.multi_reduction <add>, %129, %cst_62 [1] : vector<4x256xf32> to vector<4xf32>
    %131 = vector.shape_cast %130 : vector<4xf32> to vector<4x1xf32>
    %132 = arith.addf %128, %131 : vector<4x1xf32>
    %c0_63 = arith.constant 0 : index
    %c0_64 = arith.constant 0 : index
    %c0_65 = arith.constant 0 : index
    %133 = vector.load %arg10[%c0_63, %c0_64, %c0_65] : memref<1x4x1xf32, #tpu.memory_space<vmem>>, vector<1x4x1xf32>
    %134 = vector.shape_cast %133 : vector<1x4x1xf32> to vector<4x1xf32>
    %135 = vector.shape_cast %132 : vector<4x1xf32> to vector<1x4x1xf32>
    tpu.vector_store %arg10[%c0_63, %c0_64, %c0_65], %135 {strides = array<i32>} : memref<1x4x1xf32, #tpu.memory_space<vmem>>, vector<1x4x1xf32>,
    return
  }
  func.func @transform_0(%arg0: i32, %arg1: i32) -> (i32, i32, i32, i32) {
    %c0_i32 = arith.constant 0 : i32
    %c0_i32_0 = arith.constant 0 : i32
    %c0_i32_1 = arith.constant 0 : i32
    return %arg0, %c0_i32, %c0_i32_0, %arg1 : i32, i32, i32, i32
  }
  func.func @transform_1(%arg0: i32, %arg1: i32) -> (i32, i32) {
    %c0_i32 = arith.constant 0 : i32
    %c0_i32_0 = arith.constant 0 : i32
    %c0_i32_1 = arith.constant 0 : i32
    return %c0_i32, %c0_i32_0 : i32, i32
  }
  func.func @transform_2(%arg0: i32, %arg1: i32) -> (i32, i32) {
    %c0_i32 = arith.constant 0 : i32
    %c0_i32_0 = arith.constant 0 : i32
    %c0_i32_1 = arith.constant 0 : i32
    return %c0_i32, %c0_i32_0 : i32, i32
  }
  func.func @transform_3(%arg0: i32, %arg1: i32) -> (i32, i32) {
    %c0_i32 = arith.constant 0 : i32
    %c0_i32_0 = arith.constant 0 : i32
    %c0_i32_1 = arith.constant 0 : i32
    return %c0_i32, %c0_i32_0 : i32, i32
  }
  func.func @transform_4(%arg0: i32, %arg1: i32) -> (i32, i32) {
    %c0_i32 = arith.constant 0 : i32
    %c0_i32_0 = arith.constant 0 : i32
    %c0_i32_1 = arith.constant 0 : i32
    return %c0_i32, %c0_i32_0 : i32, i32
  }
  func.func @transform_5(%arg0: i32, %arg1: i32) -> (i32, i32) {
    %c0_i32 = arith.constant 0 : i32
    %c0_i32_0 = arith.constant 0 : i32
    %c0_i32_1 = arith.constant 0 : i32
    return %c0_i32, %c0_i32_0 : i32, i32
  }
  func.func @transform_6(%arg0: i32, %arg1: i32) -> (i32, i32, i32) {
    %c0_i32 = arith.constant 0 : i32
    %c0_i32_0 = arith.constant 0 : i32
    return %arg0, %c0_i32, %arg1 : i32, i32, i32
  }
  func.func @transform_7(%arg0: i32, %arg1: i32) -> (i32, i32, i32) {
    %c0_i32 = arith.constant 0 : i32
    %c0_i32_0 = arith.constant 0 : i32
    %c0_i32_1 = arith.constant 0 : i32
    return %arg0, %c0_i32, %c0_i32_0 : i32, i32, i32
  }
  func.func @transform_8(%arg0: i32, %arg1: i32) -> (i32, i32, i32) {
    %c0_i32 = arith.constant 0 : i32
    %c0_i32_0 = arith.constant 0 : i32
    %c0_i32_1 = arith.constant 0 : i32
    return %arg0, %c0_i32, %c0_i32_0 : i32, i32, i32
  }
}

module attributes {stable_mosaic.version = 11 : i64} {
  func.func @_bn_swish_kernel(%arg0: i32, %arg1: i32, %arg2: memref<1x4x256xf32, #tpu.memory_space<vmem>>, %arg3: memref<4x1xf32, #tpu.memory_space<vmem>>, %arg4: memref<4x1xf32, #tpu.memory_space<vmem>>, %arg5: memref<1x4x256xf32, #tpu.memory_space<vmem>>) attributes {dimension_semantics = [#tpu.dimension_semantics<parallel>, #tpu.dimension_semantics<parallel>], iteration_bounds = array<i64: 2, 1>, scalar_prefetch = 0 : i64, scratch_operands = 0 : i64, tpu.core_type = #tpu.core_type<tc>, window_params = [{transform_indices = @transform_0, window_bounds = array<i64: 1, 4, 256>}, {pipeline_mode = #tpu.pipeline_mode<synchronous>, transform_indices = @transform_1, window_bounds = array<i64: 4, 1>}, {pipeline_mode = #tpu.pipeline_mode<synchronous>, transform_indices = @transform_2, window_bounds = array<i64: 4, 1>}, {transform_indices = @transform_3, window_bounds = array<i64: 1, 4, 256>}]} {
    %c0 = arith.constant 0 : index
    %c0_0 = arith.constant 0 : index
    %c0_1 = arith.constant 0 : index
    %0 = vector.load %arg2[%c0, %c0_0, %c0_1] : memref<1x4x256xf32, #tpu.memory_space<vmem>>, vector<1x4x256xf32>
    %1 = vector.shape_cast %0 : vector<1x4x256xf32> to vector<4x256xf32>
    %c0_2 = arith.constant 0 : index
    %c0_3 = arith.constant 0 : index
    %2 = vector.load %arg3[%c0_2, %c0_3] : memref<4x1xf32, #tpu.memory_space<vmem>>, vector<4x1xf32>
    %3 = vector.broadcast %2 : vector<4x1xf32> to vector<4x256xf32>
    %4 = arith.mulf %1, %3 : vector<4x256xf32>
    %c0_4 = arith.constant 0 : index
    %c0_5 = arith.constant 0 : index
    %5 = vector.load %arg4[%c0_4, %c0_5] : memref<4x1xf32, #tpu.memory_space<vmem>>, vector<4x1xf32>
    %6 = vector.broadcast %5 : vector<4x1xf32> to vector<4x256xf32>
    %7 = arith.addf %4, %6 : vector<4x256xf32>
    %8 = arith.negf %7 : vector<4x256xf32>
    %9 = math.exp %8 : vector<4x256xf32>
    %cst = arith.constant 1.000000e+00 : f32
    %10 = vector.broadcast %cst : f32 to vector<4x256xf32>
    %11 = arith.addf %10, %9 : vector<4x256xf32>
    %12 = arith.divf %10, %11 : vector<4x256xf32>
    %13 = arith.mulf %7, %12 : vector<4x256xf32>
    %c0_6 = arith.constant 0 : index
    %c0_7 = arith.constant 0 : index
    %c0_8 = arith.constant 0 : index
    %14 = vector.load %arg5[%c0_6, %c0_7, %c0_8] : memref<1x4x256xf32, #tpu.memory_space<vmem>>, vector<1x4x256xf32>
    %15 = vector.shape_cast %14 : vector<1x4x256xf32> to vector<4x256xf32>
    %16 = vector.shape_cast %13 : vector<4x256xf32> to vector<1x4x256xf32>
    tpu.vector_store %arg5[%c0_6, %c0_7, %c0_8], %16 {strides = array<i32>} : memref<1x4x256xf32, #tpu.memory_space<vmem>>, vector<1x4x256xf32>,
    return
  }
  func.func @transform_0(%arg0: i32, %arg1: i32) -> (i32, i32, i32) {
    %c0_i32 = arith.constant 0 : i32
    %c0_i32_0 = arith.constant 0 : i32
    return %arg0, %c0_i32, %arg1 : i32, i32, i32
  }
  func.func @transform_1(%arg0: i32, %arg1: i32) -> (i32, i32) {
    %c0_i32 = arith.constant 0 : i32
    %c0_i32_0 = arith.constant 0 : i32
    %c0_i32_1 = arith.constant 0 : i32
    return %c0_i32, %c0_i32_0 : i32, i32
  }
  func.func @transform_2(%arg0: i32, %arg1: i32) -> (i32, i32) {
    %c0_i32 = arith.constant 0 : i32
    %c0_i32_0 = arith.constant 0 : i32
    %c0_i32_1 = arith.constant 0 : i32
    return %c0_i32, %c0_i32_0 : i32, i32
  }
  func.func @transform_3(%arg0: i32, %arg1: i32) -> (i32, i32, i32) {
    %c0_i32 = arith.constant 0 : i32
    %c0_i32_0 = arith.constant 0 : i32
    return %arg0, %c0_i32, %arg1 : i32, i32, i32
  }
}

</mosaic_0001>

<llo_original>
// kernel: encoder_v2_forward.3
$region0: #{encoder_v2_forward.3}
  #allocation0 [shape = 'u32[]', space=smem, size = 0x4, offset = 0x4, fixed_abs, tag = 'smem constant byte address 0x4 - core index']
  #allocation1 [shape = 'u32[144,128]{1,0:T(1,128)}', space=vmem, size = 0x12000, scoped, tag = 'internal scratch']
  %s0 = inlined_call_operand.vmem [shape: f32[2,4,256], index: 0, kind: input, shape index: {}]
  %s1 = inlined_call_operand.vmem [shape: f32[4,1], index: 1, kind: input, shape index: {}]
  %s2 = inlined_call_operand.vmem [shape: f32[4,1], index: 2, kind: input, shape index: {}]
  %s3 = inlined_call_operand.vmem [shape: f32[2,4,256], index: 3, kind: output, shape index: {}]
  %s4 = sld [smem:[#allocation0]]
  $region45: #{encoder_v2_forward.3} parent=0
    _
  %s6 = ssub.s32 1, %s4
  %s7 = scalar_select 0, %s6, %s4
  loop: start=0, step=1, limit=4
  $region2: #{encoder_v2_forward.3} parent=0 // loop_pre_header
    _
  $region3: #{encoder_v2_forward.3} parent=0 // loop_header
    %s9 = sphi 0, %s13
    %p10 = scmp.ge.s32.totalorder %s9, 4
    %s16 = sphi 0, %s28
    %s17 = sphi 0, %s24
    %s18 = sphi 0, %s16
    %s19 = sphi 0, %s17
    %s20 = sphi 0, %s18
    %s21 = sphi 0, %s19
    %s33 = sphi 0, %s35
    %s36 = sphi 0, %s33
    %s37 = sphi 0, %s36
    %s53 = sphi 0, %s37
    %s57 = sphi 0, %s57
    %s59 = sphi 0, %s57
    %s60 = sphi 0, %s59
    %s74 = sphi 0, %s60
    %s78 = sphi 0, %s78
    %s80 = sphi 0, %s78
    %s81 = sphi 0, %s80
    %s95 = sphi 0, %s81
    %s103 = sphi 0, %s105
    %s106 = sphi 0, %s103
    %s107 = sphi 0, %s106
    %s123 = sphi 0, %s107
  $region4: #{encoder_v2_forward.3} parent=0 // loop_header_branch
    %12 = sbr.rel (%p10) target = $region8
  $region5: #{encoder_v2_forward.3} parent=0 // loop_body
    %s14 = ssub.s32 %s9, 1
    %s15 = ssub.s32 %s9, 2
    %s22 = sadd.s32 1, %s17
    %p23 = scmp.ge.s32.totalorder %s22, 1
    %s24 = scalar_select %p23, 0, %s22
    %s25 = sadd.s32 1, %s16
    %s26 = scalar_select %p23, %s25, %s16
    %p27 = scmp.ge.s32.totalorder %s26, 2
    %s28 = scalar_select %p27, 0, %s26
    %s29 = ssub.s32 %s16, %s28
    %s30 = ssub.s32 %s17, %s24
    %s31 = sor.u32 %s29, %s30
    %p32 = scmp.eq.s32.totalorder %s31, 0
    %s34 = sadd.s32 %s33, 1
    %s35 = scalar_select %p32, %s33, %s34
    %p38 = pneg %p32
    %p39 = scmp.eq.s32.totalorder %s9, 1
    %p40 = por %p38, %p39
    %p41 = scmp.ne.s32.totalorder %s33, %s36
    %p42 = scmp.eq.s32.totalorder %s9, 0
    %p43 = por %p41, %p42
    %p44 = scmp.ne.s32.totalorder %s33, %s36
    %p45 = scmp.eq.s32.totalorder %s14, 1
    %p46 = por %p44, %p45
    %p47 = scmp.ne.s32.totalorder %s36, %s37
    %p48 = scmp.eq.s32.totalorder %s14, 0
    %p49 = por %p47, %p48
    %p50 = scmp.ne.s32.totalorder %s36, %s37
    %p51 = scmp.eq.s32.totalorder %s15, 1
    %p52 = por %p50, %p51
    %p54 = scmp.ne.s32.totalorder %s37, %s53
    %p55 = scmp.eq.s32.totalorder %s15, 0
    %p56 = por %p54, %p55
    %s58 = sadd.s32 %s57, 1
    %p61 = scmp.eq.s32.totalorder %s9, 1
    %p62 = scmp.ne.s32.totalorder %s57, %s59
    %p63 = scmp.eq.s32.totalorder %s9, 0
    %p64 = por %p62, %p63
    %p65 = scmp.ne.s32.totalorder %s57, %s59
    %p66 = scmp.eq.s32.totalorder %s14, 1
    %p67 = por %p65, %p66
    %p68 = scmp.ne.s32.totalorder %s59, %s60
    %p69 = scmp.eq.s32.totalorder %s14, 0
    %p70 = por %p68, %p69
    %p71 = scmp.ne.s32.totalorder %s59, %s60
    %p72 = scmp.eq.s32.totalorder %s15, 1
    %p73 = por %p71, %p72
    %p75 = scmp.ne.s32.totalorder %s60, %s74
    %p76 = scmp.eq.s32.totalorder %s15, 0
    %p77 = por %p75, %p76
    %s79 = sadd.s32 %s78, 1
    %p82 = scmp.eq.s32.totalorder %s9, 1
    %p83 = scmp.ne.s32.totalorder %s78, %s80
    %p84 = scmp.eq.s32.totalorder %s9, 0
    %p85 = por %p83, %p84
    %p86 = scmp.ne.s32.totalorder %s78, %s80
    %p87 = scmp.eq.s32.totalorder %s14, 1
    %p88 = por %p86, %p87
    %p89 = scmp.ne.s32.totalorder %s80, %s81
    %p90 = scmp.eq.s32.totalorder %s14, 0
    %p91 = por %p89, %p90
    %p92 = scmp.ne.s32.totalorder %s80, %s81
    %p93 = scmp.eq.s32.totalorder %s15, 1
    %p94 = por %p92, %p93
    %p96 = scmp.ne.s32.totalorder %s81, %s95
    %p97 = scmp.eq.s32.totalorder %s15, 0
    %p98 = por %p96, %p97
    %s99 = ssub.s32 %s16, %s28
    %s100 = ssub.s32 %s17, %s24
    %s101 = sor.u32 %s99, %s100
    %p102 = scmp.eq.s32.totalorder %s101, 0
    %s104 = sadd.s32 %s103, 1
    %s105 = scalar_select %p102, %s103, %s104
    %p108 = pneg %p102
    %p109 = scmp.eq.s32.totalorder %s9, 1
    %p110 = por %p108, %p109
    %p111 = scmp.ne.s32.totalorder %s103, %s106
    %p112 = scmp.eq.s32.totalorder %s9, 0
    %p113 = por %p111, %p112
    %p114 = scmp.ne.s32.totalorder %s103, %s106
    %p115 = scmp.eq.s32.totalorder %s14, 1
    %p116 = por %p114, %p115
    %p117 = scmp.ne.s32.totalorder %s106, %s107
    %p118 = scmp.eq.s32.totalorder %s14, 0
    %p119 = por %p117, %p118
    %p120 = scmp.ne.s32.totalorder %s106, %s107
    %p121 = scmp.eq.s32.totalorder %s15, 1
    %p122 = por %p120, %p121
    %p124 = scmp.ne.s32.totalorder %s107, %s123
    %p125 = scmp.eq.s32.totalorder %s15, 0
    %p126 = por %p124, %p125
    %p127 = scmp.le.s32.totalorder 1, %s9
    %p128 = scmp.lt.s32.totalorder %s9, 3
    %p129 = pnand %p127, %p128
    %p130 = pneg %p129
    // Predicated region
    $region9: #{encoder_v2_forward.3} parent=5 // pred_check
      _
    $region10: #{encoder_v2_forward.3} parent=5 // pred_check_branch
      %132 = sbr.rel (%p129) target = $region12
    $region11: #{encoder_v2_forward.3} parent=5 // pred_region
      %s133 = ssub.s32 %s9, 1
      // Predicated region
      $region13: #{encoder_v2_forward.3} parent=11 // pred_check
        %p134 = pneg %p70
      $region14: #{encoder_v2_forward.3} parent=11 // pred_check_branch
        %136 = sbr.rel (%p134) target = $region16
      $region15: #{encoder_v2_forward.3} parent=11 // pred_region
        _
      $region16: #{encoder_v2_forward.3} parent=11 // pred_fallthru
        _
      // Predicated region
      $region17: #{encoder_v2_forward.3} parent=11 // pred_check
        %p137 = pneg %p91
      $region18: #{encoder_v2_forward.3} parent=11 // pred_check_branch
        %139 = sbr.rel (%p137) target = $region20
      $region19: #{encoder_v2_forward.3} parent=11 // pred_region
        _
      $region20: #{encoder_v2_forward.3} parent=11 // pred_fallthru
        _
    $region12: #{encoder_v2_forward.3} parent=5 // pred_fallthru
      _
    %p140 = scmp.lt.s32.totalorder %s9, 2
    // Predicated region
    $region21: #{encoder_v2_forward.3} parent=5 // pred_check
      %p141 = pneg %p140
    $region22: #{encoder_v2_forward.3} parent=5 // pred_check_branch
      %143 = sbr.rel (%p141) target = $region24
    $region23: #{encoder_v2_forward.3} parent=5 // pred_region
      // Predicated region
      $region25: #{encoder_v2_forward.3} parent=23 // pred_check
        %p144 = pneg %p43
      $region26: #{encoder_v2_forward.3} parent=23 // pred_check_branch
        %146 = sbr.rel (%p144) target = $region28
      $region27: #{encoder_v2_forward.3} parent=23 // pred_region
        %s147 = smul.u32 2, %s17
        %p148 = scmp.lt.s32.totalorder %s16, 1
        %s149 = scalar_select %p148, %s16, 1
        %p150 = scmp.lt.s32.totalorder %s147, 1
        %s151 = scalar_select %p150, %s147, 1
        %s152 = smul.addr %s149, 2
        %s153 = sadd.s32 %s151, %s152
        %s154 = smul.addr %s153, 4
        %s155 = scalar_lea.vmem %s0, %s154
        %s156 = smul.u32 2, %s17
      $region28: #{encoder_v2_forward.3} parent=23 // pred_fallthru
        _
    $region24: #{encoder_v2_forward.3} parent=5 // pred_fallthru
      _
    %p157 = scmp.le.s32.totalorder 1, %s9
    %p158 = scmp.lt.s32.totalorder %s9, 3
    %p159 = pnand %p157, %p158
    %p160 = pneg %p159
    // Predicated region
    $region29: #{encoder_v2_forward.3} parent=5 // pred_check
      _
    $region30: #{encoder_v2_forward.3} parent=5 // pred_check_branch
      %162 = sbr.rel (%p159) target = $region32
    $region31: #{encoder_v2_forward.3} parent=5 // pred_region
      %s163 = ssub.s32 %s9, 1
      %s164 = smul.u32 2, %s19
      %p165 = scmp.lt.s32.totalorder %s18, 1
      %s166 = scalar_select %p165, %s18, 1
      %p167 = scmp.lt.s32.totalorder %s164, 1
      %s168 = scalar_select %p167, %s164, 1
      %s169 = smul.addr %s166, 2
      %s170 = sadd.s32 %s168, %s169
      %s171 = smul.addr %s170, 4
      %s172 = scalar_lea.vmem %s0, %s171
      %p173 = pneg %p49
      %p174 = pneg %p46
      %p175 = pneg %p70
      %p176 = pneg %p67
      %p177 = pneg %p91
      %p178 = pneg %p88
      %p179 = pneg %p119
      %p180 = pneg %p116
      %s181 = smul.u32 2, %s19
      %p182 = scmp.lt.s32.totalorder %s18, 1
      %s183 = scalar_select %p182, %s18, 1
      %p184 = scmp.lt.s32.totalorder %s181, 1
      %s185 = scalar_select %p184, %s181, 1
      %s186 = smul.addr %s183, 2
      %s187 = sadd.s32 %s185, %s186
      %s188 = smul.addr %s187, 4
      %s189 = scalar_lea.vmem %s3, %s188
      %s190 = smul.u32 2, %s19
      %p191 = scmp.lt.s32.totalorder %s18, 1
      %s192 = scalar_select %p191, %s18, 1
      %p193 = scmp.lt.s32.totalorder %s190, 1
      %s194 = scalar_select %p193, %s190, 1
      %s195 = smul.addr %s192, 2
      %s196 = sadd.s32 %s194, %s195
      %s197 = smul.addr %s196, 4
      %s198 = scalar_lea.vmem %s0, %s197
      %s199 = smul.u32 2, %s19
      %s200 = smul.u32 2, %s19
      %p201 = scmp.lt.s32.totalorder %s18, 1
      %s202 = scalar_select %p201, %s18, 1
      %p203 = scmp.lt.s32.totalorder %s200, 1
      %s204 = scalar_select %p203, %s200, 1
      %s205 = smul.addr %s202, 2
      %s206 = sadd.s32 %s204, %s205
      %s207 = smul.addr %s206, 4
      %s208 = scalar_lea.vmem %s3, %s207
      %s209 = smul.u32 2, %s19
      %v210 = vld [vmem:[%s198] sm:$0xff]
      %v211 = vld [vmem:[%s1] sm:$0xf]
      %213 = vset.pattern.permute.xlu0 0
      %214 = vperm.xlu0 %213, %v211
      %v215 = vpop.permute.xlu0 %214
      %v217 = vunpack.c.l.s4 839922192
      %v218 = vunpack.c.0.s8 %v217
      %v219 = vlaneseq
      %v220 = vshrl.u32 %v219, 7
      %v221 = vsub.s32 %v218, %v220
      %v222 = vrot.slane %v215, %v221
      %v224 = vmul.f32 %v210, %v222
      %v225 = vld [vmem:[%s2] sm:$0xf]
      %227 = vset.pattern.permute.xlu0 0
      %228 = vperm.xlu0 %227, %v225
      %v229 = vpop.permute.xlu0 %228
      %v231 = vunpack.c.l.s4 839922192
      %v232 = vunpack.c.0.s8 %v231
      %v233 = vlaneseq
      %v234 = vshrl.u32 %v233, 7
      %v235 = vsub.s32 %v232, %v234
      %v236 = vrot.slane %v229, %v235
      %v238 = vadd.f32 %v224, %v236
      %v239 = vxor.u32 %v238, 2147483648
      %v240 = vmul.f32 %v239, 1.442695
      %v241 = vpow.pop %v240
      %v242 = vadd.f32 %v241, 1.0
      %v243 = vrcp.pop %v242
      %v244 = vmul.f32 1.0, %v243
      %v245 = vmul.f32 %v238, %v244
      %246 = vst [vmem:[%s208] sm:$0xff] %v245
      %s247 = smul.u32 2, %s19
      %p248 = scmp.lt.s32.totalorder %s18, 1
      %s249 = scalar_select %p248, %s18, 1
      %p250 = scmp.lt.s32.totalorder %s247, 1
      %s251 = scalar_select %p250, %s247, 1
      %s252 = smul.addr %s249, 2
      %s253 = sadd.s32 %s251, %s252
      %s254 = smul.addr %s253, 4
      %s255 = scalar_lea.vmem %s3, %s254
      // Predicated region
      $region33: #{encoder_v2_forward.3} parent=31 // pred_check
        %p256 = pneg %p116
      $region34: #{encoder_v2_forward.3} parent=31 // pred_check_branch
        %258 = sbr.rel (%p256) target = $region36
      $region35: #{encoder_v2_forward.3} parent=31 // pred_region
        %s259 = smul.u32 2, %s19
      $region36: #{encoder_v2_forward.3} parent=31 // pred_fallthru
        _
    $region32: #{encoder_v2_forward.3} parent=5 // pred_fallthru
      _
    %p260 = scmp.le.s32.totalorder 2, %s9
    // Predicated region
    $region37: #{encoder_v2_forward.3} parent=5 // pred_check
      %p261 = pneg %p260
    $region38: #{encoder_v2_forward.3} parent=5 // pred_check_branch
      %263 = sbr.rel (%p261) target = $region40
    $region39: #{encoder_v2_forward.3} parent=5 // pred_region
      %s264 = ssub.s32 %s9, 2
      // Predicated region
      $region41: #{encoder_v2_forward.3} parent=39 // pred_check
        %p265 = pneg %p122
      $region42: #{encoder_v2_forward.3} parent=39 // pred_check_branch
        %267 = sbr.rel (%p265) target = $region44
      $region43: #{encoder_v2_forward.3} parent=39 // pred_region
        %s268 = smul.u32 2, %s21
        %p269 = scmp.lt.s32.totalorder %s20, 1
        %s270 = scalar_select %p269, %s20, 1
        %p271 = scmp.lt.s32.totalorder %s268, 1
        %s272 = scalar_select %p271, %s268, 1
        %s273 = smul.addr %s270, 2
        %s274 = sadd.s32 %s272, %s273
        %s275 = smul.addr %s274, 4
        %s276 = scalar_lea.vmem %s3, %s275
      $region44: #{encoder_v2_forward.3} parent=39 // pred_fallthru
        _
    $region40: #{encoder_v2_forward.3} parent=5 // pred_fallthru
      _
  $region6: #{encoder_v2_forward.3} parent=0 // loop_footer
    %s13 = sadd.s32 1, %s9
  $region7: #{encoder_v2_forward.3} parent=0 // loop_footer_branch
    %8 = sbr.rel target = $region3
  $region8: #{encoder_v2_forward.3} parent=0 // loop_exit
    _

// kernel: encoder_v2_forward.2
$region0: #{encoder_v2_forward.2}
  #allocation0 [shape = 'u32[]', space=smem, size = 0x4, offset = 0x4, fixed_abs, tag = 'smem constant byte address 0x4 - core index']
  #allocation1 [shape = 'u32[144,128]{1,0:T(1,128)}', space=vmem, size = 0x12000, scoped, tag = 'internal scratch']
  %s0 = inlined_call_operand.vmem [shape: f32[2,4,9,256], index: 0, kind: input, shape index: {}]
  %s1 = inlined_call_operand.vmem [shape: f32[9,9], index: 1, kind: input, shape index: {}]
  %s2 = inlined_call_operand.vmem [shape: f32[9,9], index: 2, kind: input, shape index: {}]
  %s3 = inlined_call_operand.vmem [shape: f32[9,1], index: 3, kind: input, shape index: {}]
  %s4 = inlined_call_operand.vmem [shape: f32[4,9], index: 4, kind: input, shape index: {}]
  %s5 = inlined_call_operand.vmem [shape: f32[4,1], index: 5, kind: input, shape index: {}]
  %s6 = inlined_call_operand.vmem [shape: f32[2,4,256], index: 6, kind: output, shape index: {0}]
  %s7 = inlined_call_operand.vmem [shape: f32[2,4,1], index: 7, kind: output, shape index: {1}]
  %s8 = inlined_call_operand.vmem [shape: f32[2,4,1], index: 8, kind: output, shape index: {2}]
  %9 = xla_tuple %s6, %s7, %s8
  %s10 = sld [smem:[#allocation0]]
  $region77: #{encoder_v2_forward.2} parent=0
    _
  %s12 = ssub.s32 1, %s10
  %s13 = scalar_select 0, %s12, %s10
  loop: start=0, step=1, limit=4
  $region2: #{encoder_v2_forward.2} parent=0 // loop_pre_header
    _
  $region3: #{encoder_v2_forward.2} parent=0 // loop_header
    %s15 = sphi 0, %s19
    %p16 = scmp.ge.s32.totalorder %s15, 4
    %s22 = sphi 0, %s34
    %s23 = sphi 0, %s30
    %s24 = sphi 0, %s22
    %s25 = sphi 0, %s23
    %s26 = sphi 0, %s24
    %s27 = sphi 0, %s25
    %s39 = sphi 0, %s41
    %s42 = sphi 0, %s39
    %s43 = sphi 0, %s42
    %s59 = sphi 0, %s43
    %s63 = sphi 0, %s63
    %s65 = sphi 0, %s63
    %s66 = sphi 0, %s65
    %s80 = sphi 0, %s66
    %s84 = sphi 0, %s84
    %s86 = sphi 0, %s84
    %s87 = sphi 0, %s86
    %s101 = sphi 0, %s87
    %s105 = sphi 0, %s105
    %s107 = sphi 0, %s105
    %s108 = sphi 0, %s107
    %s122 = sphi 0, %s108
    %s126 = sphi 0, %s126
    %s128 = sphi 0, %s126
    %s129 = sphi 0, %s128
    %s143 = sphi 0, %s129
    %s147 = sphi 0, %s147
    %s149 = sphi 0, %s147
    %s150 = sphi 0, %s149
    %s164 = sphi 0, %s150
    %s172 = sphi 0, %s174
    %s175 = sphi 0, %s172
    %s176 = sphi 0, %s175
    %s192 = sphi 0, %s176
    %s198 = sphi 0, %s200
    %s201 = sphi 0, %s198
    %s202 = sphi 0, %s201
    %s218 = sphi 0, %s202
    %s224 = sphi 0, %s226
    %s227 = sphi 0, %s224
    %s228 = sphi 0, %s227
    %s244 = sphi 0, %s228
  $region4: #{encoder_v2_forward.2} parent=0 // loop_header_branch
    %18 = sbr.rel (%p16) target = $region8
  $region5: #{encoder_v2_forward.2} parent=0 // loop_body
    %s20 = ssub.s32 %s15, 1
    %s21 = ssub.s32 %s15, 2
    %s28 = sadd.s32 1, %s23
    %p29 = scmp.ge.s32.totalorder %s28, 1
    %s30 = scalar_select %p29, 0, %s28
    %s31 = sadd.s32 1, %s22
    %s32 = scalar_select %p29, %s31, %s22
    %p33 = scmp.ge.s32.totalorder %s32, 2
    %s34 = scalar_select %p33, 0, %s32
    %s35 = ssub.s32 %s22, %s34
    %s36 = ssub.s32 %s23, %s30
    %s37 = sor.u32 %s35, %s36
    %p38 = scmp.eq.s32.totalorder %s37, 0
    %s40 = sadd.s32 %s39, 1
    %s41 = scalar_select %p38, %s39, %s40
    %p44 = pneg %p38
    %p45 = scmp.eq.s32.totalorder %s15, 1
    %p46 = por %p44, %p45
    %p47 = scmp.ne.s32.totalorder %s39, %s42
    %p48 = scmp.eq.s32.totalorder %s15, 0
    %p49 = por %p47, %p48
    %p50 = scmp.ne.s32.totalorder %s39, %s42
    %p51 = scmp.eq.s32.totalorder %s20, 1
    %p52 = por %p50, %p51
    %p53 = scmp.ne.s32.totalorder %s42, %s43
    %p54 = scmp.eq.s32.totalorder %s20, 0
    %p55 = por %p53, %p54
    %p56 = scmp.ne.s32.totalorder %s42, %s43
    %p57 = scmp.eq.s32.totalorder %s21, 1
    %p58 = por %p56, %p57
    %p60 = scmp.ne.s32.totalorder %s43, %s59
    %p61 = scmp.eq.s32.totalorder %s21, 0
    %p62 = por %p60, %p61
    %s64 = sadd.s32 %s63, 1
    %p67 = scmp.eq.s32.totalorder %s15, 1
    %p68 = scmp.ne.s32.totalorder %s63, %s65
    %p69 = scmp.eq.s32.totalorder %s15, 0
    %p70 = por %p68, %p69
    %p71 = scmp.ne.s32.totalorder %s63, %s65
    %p72 = scmp.eq.s32.totalorder %s20, 1
    %p73 = por %p71, %p72
    %p74 = scmp.ne.s32.totalorder %s65, %s66
    %p75 = scmp.eq.s32.totalorder %s20, 0
    %p76 = por %p74, %p75
    %p77 = scmp.ne.s32.totalorder %s65, %s66
    %p78 = scmp.eq.s32.totalorder %s21, 1
    %p79 = por %p77, %p78
    %p81 = scmp.ne.s32.totalorder %s66, %s80
    %p82 = scmp.eq.s32.totalorder %s21, 0
    %p83 = por %p81, %p82
    %s85 = sadd.s32 %s84, 1
    %p88 = scmp.eq.s32.totalorder %s15, 1
    %p89 = scmp.ne.s32.totalorder %s84, %s86
    %p90 = scmp.eq.s32.totalorder %s15, 0
    %p91 = por %p89, %p90
    %p92 = scmp.ne.s32.totalorder %s84, %s86
    %p93 = scmp.eq.s32.totalorder %s20, 1
    %p94 = por %p92, %p93
    %p95 = scmp.ne.s32.totalorder %s86, %s87
    %p96 = scmp.eq.s32.totalorder %s20, 0
    %p97 = por %p95, %p96
    %p98 = scmp.ne.s32.totalorder %s86, %s87
    %p99 = scmp.eq.s32.totalorder %s21, 1
    %p100 = por %p98, %p99
    %p102 = scmp.ne.s32.totalorder %s87, %s101
    %p103 = scmp.eq.s32.totalorder %s21, 0
    %p104 = por %p102, %p103
    %s106 = sadd.s32 %s105, 1
    %p109 = scmp.eq.s32.totalorder %s15, 1
    %p110 = scmp.ne.s32.totalorder %s105, %s107
    %p111 = scmp.eq.s32.totalorder %s15, 0
    %p112 = por %p110, %p111
    %p113 = scmp.ne.s32.totalorder %s105, %s107
    %p114 = scmp.eq.s32.totalorder %s20, 1
    %p115 = por %p113, %p114
    %p116 = scmp.ne.s32.totalorder %s107, %s108
    %p117 = scmp.eq.s32.totalorder %s20, 0
    %p118 = por %p116, %p117
    %p119 = scmp.ne.s32.totalorder %s107, %s108
    %p120 = scmp.eq.s32.totalorder %s21, 1
    %p121 = por %p119, %p120
    %p123 = scmp.ne.s32.totalorder %s108, %s122
    %p124 = scmp.eq.s32.totalorder %s21, 0
    %p125 = por %p123, %p124
    %s127 = sadd.s32 %s126, 1
    %p130 = scmp.eq.s32.totalorder %s15, 1
    %p131 = scmp.ne.s32.totalorder %s126, %s128
    %p132 = scmp.eq.s32.totalorder %s15, 0
    %p133 = por %p131, %p132
    %p134 = scmp.ne.s32.totalorder %s126, %s128
    %p135 = scmp.eq.s32.totalorder %s20, 1
    %p136 = por %p134, %p135
    %p137 = scmp.ne.s32.totalorder %s128, %s129
    %p138 = scmp.eq.s32.totalorder %s20, 0
    %p139 = por %p137, %p138
    %p140 = scmp.ne.s32.totalorder %s128, %s129
    %p141 = scmp.eq.s32.totalorder %s21, 1
    %p142 = por %p140, %p141
    %p144 = scmp.ne.s32.totalorder %s129, %s143
    %p145 = scmp.eq.s32.totalorder %s21, 0
    %p146 = por %p144, %p145
    %s148 = sadd.s32 %s147, 1
    %p151 = scmp.eq.s32.totalorder %s15, 1
    %p152 = scmp.ne.s32.totalorder %s147, %s149
    %p153 = scmp.eq.s32.totalorder %s15, 0
    %p154 = por %p152, %p153
    %p155 = scmp.ne.s32.totalorder %s147, %s149
    %p156 = scmp.eq.s32.totalorder %s20, 1
    %p157 = por %p155, %p156
    %p158 = scmp.ne.s32.totalorder %s149, %s150
    %p159 = scmp.eq.s32.totalorder %s20, 0
    %p160 = por %p158, %p159
    %p161 = scmp.ne.s32.totalorder %s149, %s150
    %p162 = scmp.eq.s32.totalorder %s21, 1
    %p163 = por %p161, %p162
    %p165 = scmp.ne.s32.totalorder %s150, %s164
    %p166 = scmp.eq.s32.totalorder %s21, 0
    %p167 = por %p165, %p166
    %s168 = ssub.s32 %s22, %s34
    %s169 = ssub.s32 %s23, %s30
    %s170 = sor.u32 %s168, %s169
    %p171 = scmp.eq.s32.totalorder %s170, 0
    %s173 = sadd.s32 %s172, 1
    %s174 = scalar_select %p171, %s172, %s173
    %p177 = pneg %p171
    %p178 = scmp.eq.s32.totalorder %s15, 1
    %p179 = por %p177, %p178
    %p180 = scmp.ne.s32.totalorder %s172, %s175
    %p181 = scmp.eq.s32.totalorder %s15, 0
    %p182 = por %p180, %p181
    %p183 = scmp.ne.s32.totalorder %s172, %s175
    %p184 = scmp.eq.s32.totalorder %s20, 1
    %p185 = por %p183, %p184
    %p186 = scmp.ne.s32.totalorder %s175, %s176
    %p187 = scmp.eq.s32.totalorder %s20, 0
    %p188 = por %p186, %p187
    %p189 = scmp.ne.s32.totalorder %s175, %s176
    %p190 = scmp.eq.s32.totalorder %s21, 1
    %p191 = por %p189, %p190
    %p193 = scmp.ne.s32.totalorder %s176, %s192
    %p194 = scmp.eq.s32.totalorder %s21, 0
    %p195 = por %p193, %p194
    %s196 = ssub.s32 %s22, %s34
    %p197 = scmp.eq.s32.totalorder %s196, 0
    %s199 = sadd.s32 %s198, 1
    %s200 = scalar_select %p197, %s198, %s199
    %p203 = pneg %p197
    %p204 = scmp.eq.s32.totalorder %s15, 1
    %p205 = por %p203, %p204
    %p206 = scmp.ne.s32.totalorder %s198, %s201
    %p207 = scmp.eq.s32.totalorder %s15, 0
    %p208 = por %p206, %p207
    %p209 = scmp.ne.s32.totalorder %s198, %s201
    %p210 = scmp.eq.s32.totalorder %s20, 1
    %p211 = por %p209, %p210
    %p212 = scmp.ne.s32.totalorder %s201, %s202
    %p213 = scmp.eq.s32.totalorder %s20, 0
    %p214 = por %p212, %p213
    %p215 = scmp.ne.s32.totalorder %s201, %s202
    %p216 = scmp.eq.s32.totalorder %s21, 1
    %p217 = por %p215, %p216
    %p219 = scmp.ne.s32.totalorder %s202, %s218
    %p220 = scmp.eq.s32.totalorder %s21, 0
    %p221 = por %p219, %p220
    %s222 = ssub.s32 %s22, %s34
    %p223 = scmp.eq.s32.totalorder %s222, 0
    %s225 = sadd.s32 %s224, 1
    %s226 = scalar_select %p223, %s224, %s225
    %p229 = pneg %p223
    %p230 = scmp.eq.s32.totalorder %s15, 1
    %p231 = por %p229, %p230
    %p232 = scmp.ne.s32.totalorder %s224, %s227
    %p233 = scmp.eq.s32.totalorder %s15, 0
    %p234 = por %p232, %p233
    %p235 = scmp.ne.s32.totalorder %s224, %s227
    %p236 = scmp.eq.s32.totalorder %s20, 1
    %p237 = por %p235, %p236
    %p238 = scmp.ne.s32.totalorder %s227, %s228
    %p239 = scmp.eq.s32.totalorder %s20, 0
    %p240 = por %p238, %p239
    %p241 = scmp.ne.s32.totalorder %s227, %s228
    %p242 = scmp.eq.s32.totalorder %s21, 1
    %p243 = por %p241, %p242
    %p245 = scmp.ne.s32.totalorder %s228, %s244
    %p246 = scmp.eq.s32.totalorder %s21, 0
    %p247 = por %p245, %p246
    %p248 = scmp.le.s32.totalorder 1, %s15
    %p249 = scmp.lt.s32.totalorder %s15, 3
    %p250 = pnand %p248, %p249
    %p251 = pneg %p250
    // Predicated region
    $region9: #{encoder_v2_forward.2} parent=5 // pred_check
      _
    $region10: #{encoder_v2_forward.2} parent=5 // pred_check_branch
      %253 = sbr.rel (%p250) target = $region12
    $region11: #{encoder_v2_forward.2} parent=5 // pred_region
      %s254 = ssub.s32 %s15, 1
      // Predicated region
      $region13: #{encoder_v2_forward.2} parent=11 // pred_check
        %p255 = pneg %p76
      $region14: #{encoder_v2_forward.2} parent=11 // pred_check_branch
        %257 = sbr.rel (%p255) target = $region16
      $region15: #{encoder_v2_forward.2} parent=11 // pred_region
        _
      $region16: #{encoder_v2_forward.2} parent=11 // pred_fallthru
        _
      // Predicated region
      $region17: #{encoder_v2_forward.2} parent=11 // pred_check
        %p258 = pneg %p97
      $region18: #{encoder_v2_forward.2} parent=11 // pred_check_branch
        %260 = sbr.rel (%p258) target = $region20
      $region19: #{encoder_v2_forward.2} parent=11 // pred_region
        _
      $region20: #{encoder_v2_forward.2} parent=11 // pred_fallthru
        _
      // Predicated region
      $region21: #{encoder_v2_forward.2} parent=11 // pred_check
        %p261 = pneg %p118
      $region22: #{encoder_v2_forward.2} parent=11 // pred_check_branch
        %263 = sbr.rel (%p261) target = $region24
      $region23: #{encoder_v2_forward.2} parent=11 // pred_region
        _
      $region24: #{encoder_v2_forward.2} parent=11 // pred_fallthru
        _
      // Predicated region
      $region25: #{encoder_v2_forward.2} parent=11 // pred_check
        %p264 = pneg %p139
      $region26: #{encoder_v2_forward.2} parent=11 // pred_check_branch
        %266 = sbr.rel (%p264) target = $region28
      $region27: #{encoder_v2_forward.2} parent=11 // pred_region
        _
      $region28: #{encoder_v2_forward.2} parent=11 // pred_fallthru
        _
      // Predicated region
      $region29: #{encoder_v2_forward.2} parent=11 // pred_check
        %p267 = pneg %p160
      $region30: #{encoder_v2_forward.2} parent=11 // pred_check_branch
        %269 = sbr.rel (%p267) target = $region32
      $region31: #{encoder_v2_forward.2} parent=11 // pred_region
        _
      $region32: #{encoder_v2_forward.2} parent=11 // pred_fallthru
        _
    $region12: #{encoder_v2_forward.2} parent=5 // pred_fallthru
      _
    %p270 = scmp.lt.s32.totalorder %s15, 2
    // Predicated region
    $region33: #{encoder_v2_forward.2} parent=5 // pred_check
      %p271 = pneg %p270
    $region34: #{encoder_v2_forward.2} parent=5 // pred_check_branch
      %273 = sbr.rel (%p271) target = $region36
    $region35: #{encoder_v2_forward.2} parent=5 // pred_region
      // Predicated region
      $region37: #{encoder_v2_forward.2} parent=35 // pred_check
        %p274 = pneg %p49
      $region38: #{encoder_v2_forward.2} parent=35 // pred_check_branch
        %276 = sbr.rel (%p274) target = $region40
      $region39: #{encoder_v2_forward.2} parent=35 // pred_region
        %s277 = smul.u32 2, %s23
        %p278 = scmp.lt.s32.totalorder %s22, 1
        %s279 = scalar_select %p278, %s22, 1
        %p280 = scmp.lt.s32.totalorder %s277, 1
        %s281 = scalar_select %p280, %s277, 1
        %s282 = smul.addr %s279, 16
        %s283 = sadd.s32 %s281, %s282
        %s284 = smul.addr %s283, 8
        %s285 = scalar_lea.vmem %s0, %s284
        %s286 = smul.u32 2, %s23
      $region40: #{encoder_v2_forward.2} parent=35 // pred_fallthru
        _
    $region36: #{encoder_v2_forward.2} parent=5 // pred_fallthru
      _
    %p287 = scmp.le.s32.totalorder 1, %s15
    %p288 = scmp.lt.s32.totalorder %s15, 3
    %p289 = pnand %p287, %p288
    %p290 = pneg %p289
    // Predicated region
    $region41: #{encoder_v2_forward.2} parent=5 // pred_check
      _
    $region42: #{encoder_v2_forward.2} parent=5 // pred_check_branch
      %292 = sbr.rel (%p289) target = $region44
    $region43: #{encoder_v2_forward.2} parent=5 // pred_region
      %s293 = ssub.s32 %s15, 1
      %s294 = smul.u32 2, %s25
      %p295 = scmp.lt.s32.totalorder %s24, 1
      %s296 = scalar_select %p295, %s24, 1
      %p297 = scmp.lt.s32.totalorder %s294, 1
      %s298 = scalar_select %p297, %s294, 1
      %s299 = smul.addr %s296, 16
      %s300 = sadd.s32 %s298, %s299
      %s301 = smul.addr %s300, 8
      %s302 = scalar_lea.vmem %s0, %s301
      %p303 = pneg %p55
      %p304 = pneg %p52
      %p305 = pneg %p76
      %p306 = pneg %p73
      %p307 = pneg %p97
      %p308 = pneg %p94
      %p309 = pneg %p118
      %p310 = pneg %p115
      %p311 = pneg %p139
      %p312 = pneg %p136
      %p313 = pneg %p160
      %p314 = pneg %p157
      %p315 = pneg %p188
      %p316 = pneg %p185
      %s317 = smul.u32 2, %s25
      %p318 = scmp.lt.s32.totalorder %s24, 1
      %s319 = scalar_select %p318, %s24, 1
      %p320 = scmp.lt.s32.totalorder %s317, 1
      %s321 = scalar_select %p320, %s317, 1
      %s322 = smul.addr %s319, 2
      %s323 = sadd.s32 %s321, %s322
      %s324 = smul.addr %s323, 4
      %s325 = scalar_lea.vmem %s6, %s324
      %p326 = pneg %p214
      %p327 = pneg %p211
      %p328 = scmp.lt.s32.totalorder %s24, 1
      %s329 = scalar_select %p328, %s24, 1
      %s330 = smul.addr %s329, 4
      %s331 = scalar_lea.vmem %s7, %s330
      %p332 = pneg %p240
      %p333 = pneg %p237
      %p334 = scmp.lt.s32.totalorder %s24, 1
      %s335 = scalar_select %p334, %s24, 1
      %s336 = smul.addr %s335, 4
      %s337 = scalar_lea.vmem %s8, %s336
      %s338 = smul.u32 2, %s25
      %p339 = scmp.lt.s32.totalorder %s24, 1
      %s340 = scalar_select %p339, %s24, 1
      %p341 = scmp.lt.s32.totalorder %s338, 1
      %s342 = scalar_select %p341, %s338, 1
      %s343 = smul.addr %s340, 16
      %s344 = sadd.s32 %s342, %s343
      %s345 = smul.addr %s344, 8
      %s346 = scalar_lea.vmem %s0, %s345
      %s347 = smul.u32 2, %s25
      %s348 = smul.u32 2, %s25
      %p349 = scmp.lt.s32.totalorder %s24, 1
      %s350 = scalar_select %p349, %s24, 1
      %p351 = scmp.lt.s32.totalorder %s348, 1
      %s352 = scalar_select %p351, %s348, 1
      %s353 = smul.addr %s350, 2
      %s354 = sadd.s32 %s352, %s353
      %s355 = smul.addr %s354, 4
      %s356 = scalar_lea.vmem %s6, %s355
      %s357 = smul.u32 2, %s25
      %p358 = scmp.lt.s32.totalorder %s24, 1
      %s359 = scalar_select %p358, %s24, 1
      %s360 = smul.addr %s359, 4
      %s361 = scalar_lea.vmem %s7, %s360
      %p362 = scmp.lt.s32.totalorder %s24, 1
      %s363 = scalar_select %p362, %s24, 1
      %s364 = smul.addr %s363, 4
      %s365 = scalar_lea.vmem %s8, %s364
      %v366 = vld [vmem:[%s346] sm:$0xff]
      %v367 = vld [vmem:[%s346 + $0x8] sm:$0xff]
      %v368 = vld [vmem:[%s346 + $0x10] sm:$0x1]
      %v369 = vld [vmem:[%s346 + $0x18] sm:$0x1]
      %v370 = vld [vmem:[%s346 + $0x20] sm:$0xff]
      %v371 = vld [vmem:[%s346 + $0x28] sm:$0xff]
      %v372 = vld [vmem:[%s346 + $0x30] sm:$0x1]
      %v373 = vld [vmem:[%s346 + $0x38] sm:$0x1]
      %v374 = vld [vmem:[%s346 + $0x40] sm:$0xff]
      %v375 = vld [vmem:[%s346 + $0x48] sm:$0xff]
      %v376 = vld [vmem:[%s346 + $0x50] sm:$0x1]
      %v377 = vld [vmem:[%s346 + $0x58] sm:$0x1]
      %v378 = vld [vmem:[%s346 + $0x60] sm:$0xff]
      %v379 = vld [vmem:[%s346 + $0x68] sm:$0xff]
      %v380 = vld [vmem:[%s346 + $0x70] sm:$0x1]
      %v381 = vld [vmem:[%s346 + $0x78] sm:$0x1]
      %v382 = vadd.f32 %v366, %v370
      %v383 = vadd.f32 %v382, %v374
      %v384 = vadd.f32 %v383, %v378
      %v385 = vadd.f32 %v367, %v371
      %v386 = vadd.f32 %v385, %v375
      %v387 = vadd.f32 %v386, %v379
      %vm388 = vcmask 1040384
      %v389 = vsel %vm388, %v368, 0.0
      %v390 = vsel %vm388, %v372, 0.0
      %v391 = vadd.f32 %v389, %v390
      %v392 = vsel %vm388, %v376, 0.0
      %v393 = vadd.f32 %v391, %v392
      %v394 = vsel %vm388, %v380, 0.0
      %v395 = vadd.f32 %v393, %v394
      %v396 = vsel %vm388, %v369, 0.0
      %v397 = vsel %vm388, %v373, 0.0
      %v398 = vadd.f32 %v396, %v397
      %v399 = vsel %vm388, %v377, 0.0
      %v400 = vadd.f32 %v398, %v399
      %v401 = vsel %vm388, %v381, 0.0
      %v402 = vadd.f32 %v400, %v401
      %v403 = vmul.f32 %v384, 0.25
      %v404 = vmul.f32 %v387, 0.25
      %v405 = vmul.f32 %v395, 0.25
      %v406 = vmul.f32 %v402, 0.25
      %v407 = vmax.f32 %v366, %v370
      %v408 = vmax.f32 %v407, %v374
      %v409 = vmax.f32 %v408, %v378
      %v410 = vmax.f32 %v367, %v371
      %v411 = vmax.f32 %v410, %v375
      %v412 = vmax.f32 %v411, %v379
      %v413 = vsel %vm388, %v368, -inf
      %v414 = vsel %vm388, %v372, -inf
      %v415 = vmax.f32 %v413, %v414
      %v416 = vsel %vm388, %v376, -inf
      %v417 = vmax.f32 %v415, %v416
      %v418 = vsel %vm388, %v380, -inf
      %v419 = vmax.f32 %v417, %v418
      %v420 = vsel %vm388, %v369, -inf
      %v421 = vsel %vm388, %v373, -inf
      %v422 = vmax.f32 %v420, %v421
      %v423 = vsel %vm388, %v377, -inf
      %v424 = vmax.f32 %v422, %v423
      %v425 = vsel %vm388, %v381, -inf
      %v426 = vmax.f32 %v424, %v425
      %v427 = vld [vmem:[%s1] sm:$0xff]
      %v428 = vld [vmem:[%s1 + $0x8] sm:$0x1]
      %v429 = vld [vmem:[%s2] sm:$0xff]
      %v430 = vld [vmem:[%s2 + $0x8] sm:$0x1]
      %vm431 = vcmask 72704
      %v433 = vsel %vm431, %v429, 0
      %v436 = vsel %vm431, %v430, 0
      %v439 = vsel %vm388, %v419, 0
      %v442 = vsel %vm388, %v426, 0
      %444 = vmatprep.subr.mxu0 0.0
      %445 = vmatpush1.msra.mxu0 0.0
      %446 = vmatprep.subr.mxu0 0.0
      %447 = vmatpush1.msra.mxu0 0.0
      %448 = vmatprep.subr.mxu0 0.0
      %449 = vmatpush1.msra.mxu0 0.0
      %450 = vmatprep.subr.mxu0 0.0
      %451 = vmatpush1.msra.mxu0 0.0
      %452 = vmatprep.subr.mxu0 0.0
      %453 = vmatpush1.msra.mxu0 0.0
      %454 = vmatprep.subr.mxu0 0.0
      %455 = vmatpush1.msra.mxu0 0.0
      %456 = vmatprep.subr.mxu0 0.0
      %457 = vmatpush1.msra.mxu0 0.0
      %458 = vmatprep.subr.mxu0 0.0
      %459 = vmatpush1.msra.mxu0 0.0
      %460 = vmatprep.subr.mxu0 0.0
      %461 = vmatpush1.msra.mxu0 0.0
      %462 = vmatprep.subr.mxu0 0.0
      %463 = vmatpush1.msra.mxu0 0.0
      %464 = vmatprep.subr.mxu0 0.0
      %465 = vmatpush1.msra.mxu0 0.0
      %466 = vmatprep.subr.mxu0 0.0
      %467 = vmatpush1.msra.mxu0 0.0
      %468 = vmatprep.subr.mxu0 0.0
      %469 = vmatpush1.msra.mxu0 0.0
      %470 = vmatprep.subr.mxu0 0.0
      %471 = vmatpush1.msra.mxu0 0.0
      %472 = vmatprep.subr.mxu0 %v442
      %473 = vmatpush1.msra.mxu0 %v439
      %474 = vmatprep.subr.mxu0 %v412
      %475 = vmatpush1.msra.mxu0 %v409
      %476 = vmatprep.subr.mxu0 0.0
      %477 = vmatpush2.msra.mxu0 0.0
      %478 = vmatprep.subr.mxu0 0.0
      %479 = vmatpush2.msra.mxu0 0.0
      %480 = vmatprep.subr.mxu0 0.0
      %481 = vmatpush2.msra.mxu0 0.0
      %482 = vmatprep.subr.mxu0 0.0
      %483 = vmatpush2.msra.mxu0 0.0
      %484 = vmatprep.subr.mxu0 0.0
      %485 = vmatpush2.msra.mxu0 0.0
      %486 = vmatprep.subr.mxu0 0.0
      %487 = vmatpush2.msra.mxu0 0.0
      %488 = vmatprep.subr.mxu0 0.0
      %489 = vmatpush2.msra.mxu0 0.0
      %490 = vmatprep.subr.mxu0 0.0
      %491 = vmatpush2.msra.mxu0 0.0
      %492 = vmatprep.subr.mxu0 0.0
      %493 = vmatpush2.msra.mxu0 0.0
      %494 = vmatprep.subr.mxu0 0.0
      %495 = vmatpush2.msra.mxu0 0.0
      %496 = vmatprep.subr.mxu0 0.0
      %497 = vmatpush2.msra.mxu0 0.0
      %498 = vmatprep.subr.mxu0 0.0
      %499 = vmatpush2.msra.mxu0 0.0
      %500 = vmatprep.subr.mxu0 0.0
      %501 = vmatpush2.msra.mxu0 0.0
      %502 = vmatprep.subr.mxu0 0.0
      %503 = vmatpush2.msra.mxu0 0.0
      %504 = vmatprep.subr.mxu0 0.0
      %505 = vmatpush2.msra.mxu0 0.0
      %506 = vmatprep.subr.mxu0 0.0
      %507 = vmatpush2.msra.mxu0 0.0
      %508 = vmatprep.mubr.f32.mxu0 0.0
      %509 = vmatmul.mubr.f32.gmra.mxu0 %v433
      %v510 = vpop.f32.mrf.mxu0
      %v511 = vadd.f32 0.0, %v510
      %v512 = vpop.f32.mrf.mxu0
      %v513 = vadd.f32 0.0, %v512
      %514 = vmatprep.mubr.f32.mxu0 0.0
      %515 = vmatmul.mubr.f32.gmra.mxu0 %v436
      %v516 = vpop.f32.mrf.mxu0
      %v517 = vadd.f32 0.0, %v516
      %v518 = vpop.f32.mrf.mxu0
      %v519 = vadd.f32 0.0, %v518
      %520 = vdwg.mxu0
      %v522 = vsel %vm431, %v427, 0
      %v525 = vsel %vm431, %v428, 0
      %v528 = vsel %vm388, %v405, 0
      %v531 = vsel %vm388, %v406, 0
      %533 = vmatprep.subr.mxu0 0.0
      %534 = vmatpush1.msra.mxu0 0.0
      %535 = vmatprep.subr.mxu0 0.0
      %536 = vmatpush1.msra.mxu0 0.0
      %537 = vmatprep.subr.mxu0 0.0
      %538 = vmatpush1.msra.mxu0 0.0
      %539 = vmatprep.subr.mxu0 0.0
      %540 = vmatpush1.msra.mxu0 0.0
      %541 = vmatprep.subr.mxu0 0.0
      %542 = vmatpush1.msra.mxu0 0.0
      %543 = vmatprep.subr.mxu0 0.0
      %544 = vmatpush1.msra.mxu0 0.0
      %545 = vmatprep.subr.mxu0 0.0
      %546 = vmatpush1.msra.mxu0 0.0
      %547 = vmatprep.subr.mxu0 0.0
      %548 = vmatpush1.msra.mxu0 0.0
      %549 = vmatprep.subr.mxu0 0.0
      %550 = vmatpush1.msra.mxu0 0.0
      %551 = vmatprep.subr.mxu0 0.0
      %552 = vmatpush1.msra.mxu0 0.0
      %553 = vmatprep.subr.mxu0 0.0
      %554 = vmatpush1.msra.mxu0 0.0
      %555 = vmatprep.subr.mxu0 0.0
      %556 = vmatpush1.msra.mxu0 0.0
      %557 = vmatprep.subr.mxu0 0.0
      %558 = vmatpush1.msra.mxu0 0.0
      %559 = vmatprep.subr.mxu0 0.0
      %560 = vmatpush1.msra.mxu0 0.0
      %561 = vmatprep.subr.mxu0 %v531
      %562 = vmatpush1.msra.mxu0 %v528
      %563 = vmatprep.subr.mxu0 %v404
      %564 = vmatpush1.msra.mxu0 %v403
      %565 = vmatprep.subr.mxu0 0.0
      %566 = vmatpush2.msra.mxu0 0.0
      %567 = vmatprep.subr.mxu0 0.0
      %568 = vmatpush2.msra.mxu0 0.0
      %569 = vmatprep.subr.mxu0 0.0
      %570 = vmatpush2.msra.mxu0 0.0
      %571 = vmatprep.subr.mxu0 0.0
      %572 = vmatpush2.msra.mxu0 0.0
      %573 = vmatprep.subr.mxu0 0.0
      %574 = vmatpush2.msra.mxu0 0.0
      %575 = vmatprep.subr.mxu0 0.0
      %576 = vmatpush2.msra.mxu0 0.0
      %577 = vmatprep.subr.mxu0 0.0
      %578 = vmatpush2.msra.mxu0 0.0
      %579 = vmatprep.subr.mxu0 0.0
      %580 = vmatpush2.msra.mxu0 0.0
      %581 = vmatprep.subr.mxu0 0.0
      %582 = vmatpush2.msra.mxu0 0.0
      %583 = vmatprep.subr.mxu0 0.0
      %584 = vmatpush2.msra.mxu0 0.0
      %585 = vmatprep.subr.mxu0 0.0
      %586 = vmatpush2.msra.mxu0 0.0
      %587 = vmatprep.subr.mxu0 0.0
      %588 = vmatpush2.msra.mxu0 0.0
      %589 = vmatprep.subr.mxu0 0.0
      %590 = vmatpush2.msra.mxu0 0.0
      %591 = vmatprep.subr.mxu0 0.0
      %592 = vmatpush2.msra.mxu0 0.0
      %593 = vmatprep.subr.mxu0 0.0
      %594 = vmatpush2.msra.mxu0 0.0
      %595 = vmatprep.subr.mxu0 0.0
      %596 = vmatpush2.msra.mxu0 0.0
      %597 = vmatprep.mubr.f32.mxu0 0.0
      %598 = vmatmul.mubr.f32.gmra.mxu0 %v522
      %v599 = vpop.f32.mrf.mxu0
      %v600 = vadd.f32 %v511, %v599
      %v601 = vpop.f32.mrf.mxu0
      %v602 = vadd.f32 %v513, %v601
      %603 = vmatprep.mubr.f32.mxu0 0.0
      %604 = vmatmul.mubr.f32.gmra.mxu0 %v525
      %v605 = vpop.f32.mrf.mxu0
      %v606 = vadd.f32 %v517, %v605
      %v607 = vpop.f32.mrf.mxu0
      %v608 = vadd.f32 %v519, %v607
      %609 = vdwg.mxu0
      %v610 = vld [vmem:[%s3] sm:$0xff]
      %v611 = vld [vmem:[%s3 + $0x8] sm:$0x1]
      %613 = vset.pattern.permute.xlu0 0
      %614 = vperm.xlu0 %613, %v610
      %v615 = vpop.permute.xlu0 %614
      %618 = vset.pattern.permute.xlu0 0
      %619 = vperm.xlu0 %618, %v611
      %v620 = vpop.permute.xlu0 %619
      %v622 = vadd.f32 %v600, %v615
      %v623 = vadd.f32 %v602, %v615
      %v624 = vadd.f32 %v606, %v620
      %v625 = vadd.f32 %v608, %v620
      %v626 = vxor.u32 %v622, 2147483648
      %v627 = vxor.u32 %v623, 2147483648
      %v628 = vxor.u32 %v624, 2147483648
      %v629 = vxor.u32 %v625, 2147483648
      %v630 = vmul.f32 %v626, 1.442695
      %v631 = vpow.pop %v630
      %v632 = vmul.f32 %v627, 1.442695
      %v633 = vpow.pop %v632
      %v634 = vmul.f32 %v628, 1.442695
      %v635 = vpow.pop %v634
      %v636 = vmul.f32 %v629, 1.442695
      %v637 = vpow.pop %v636
      %v638 = vadd.f32 %v631, 1.0
      %v639 = vadd.f32 %v633, 1.0
      %v640 = vadd.f32 %v635, 1.0
      %v641 = vadd.f32 %v637, 1.0
      %v642 = vrcp.pop %v638
      %v643 = vmul.f32 1.0, %v642
      %v644 = vrcp.pop %v639
      %v645 = vmul.f32 1.0, %v644
      %v646 = vrcp.pop %v640
      %v647 = vmul.f32 1.0, %v646
      %v648 = vrcp.pop %v641
      %v649 = vmul.f32 1.0, %v648
      %v650 = vadd.f32 %v643, 1.0
      %v651 = vadd.f32 %v645, 1.0
      %v652 = vadd.f32 %v647, 1.0
      %v653 = vadd.f32 %v649, 1.0
      %v654 = vld [vmem:[%s4] sm:$0xf]
      %v655 = vld [vmem:[%s5] sm:$0xf]
      %v656 = vld [vmem:[%s346] ss:$8 sm:$0x3]
      %s657 = scalar_lea.vmem %s346, 32
      %v658 = vld [vmem:[%s657] ss:$8 sm:$0x3]
      %s659 = scalar_lea.vmem %s346, 64
      %v660 = vld [vmem:[%s659] ss:$8 sm:$0x3]
      %s661 = scalar_lea.vmem %s346, 96
      %v662 = vld [vmem:[%s661] ss:$8 sm:$0x3]
      %v663 = vlaneseq
      %v664 = vshrl.u32 %v663, 7
      %v665 = vsub.s32 0, %v664
      %v666 = vrot.slane %v650, %v665
      %v667 = vlaneseq
      %v668 = vshrl.u32 %v667, 7
      %v669 = vsub.s32 0, %v668
      %v670 = vrot.slane %v651, %v669
      %v673 = vcombine.low %v666, %v670
      %v675 = vunpack.c.l.s4 1966171168
      %v676 = vunpack.c.0.s8 %v675
      %v677 = vlaneseq
      %v678 = vshrl.u32 %v677, 7
      %v679 = vsub.s32 %v676, %v678
      %v680 = vrot.slane %v673, %v679
      %v681 = vcombine.high %v680, %v680
      %v683 = vunpack.c.l.s4 1966171168
      %v684 = vunpack.c.0.s8 %v683
      %v685 = vlaneseq
      %v686 = vshrl.u32 %v685, 7
      %v687 = vsub.s32 %v684, %v686
      %v688 = vrot.slane %v680, %v687
      %v690 = vunpack.c.l.s4 1966171168
      %v691 = vunpack.c.0.s8 %v690
      %v692 = vlaneseq
      %v693 = vshrl.u32 %v692, 7
      %v694 = vsub.s32 %v691, %v693
      %v695 = vrot.slane %v681, %v694
      %v696 = vcombine.high %v688, %v688
      %v697 = vcombine.high %v695, %v695
      %v702 = vmul.f32 %v656, %v688
      %v703 = vmul.f32 %v658, %v695
      %v704 = vmul.f32 %v660, %v696
      %v705 = vmul.f32 %v662, %v697
      %707 = vset.pattern.permute.xlu0 0
      %708 = vperm.xlu0 %707, %v654
      %v709 = vpop.permute.xlu0 %708
      %v715 = vcombine.low %v702, %v703
      %v716 = vcombine.low %v704, %v705
      %v718 = vunpack.c.l.s4 1966171168
      %v719 = vunpack.c.0.s8 %v718
      %v720 = vlaneseq
      %v721 = vshrl.u32 %v720, 7
      %v722 = vsub.s32 %v719, %v721
      %v723 = vrot.slane %v715, %v722
      %v725 = vunpack.c.l.s4 1966171168
      %v726 = vunpack.c.0.s8 %v725
      %v727 = vlaneseq
      %v728 = vshrl.u32 %v727, 7
      %v729 = vsub.s32 %v726, %v728
      %v730 = vrot.slane %v716, %v729
      %v731 = vcombine.low %v723, %v730
      %v732 = vcombine.high %v723, %v730
      %v734 = vunpack.c.l.s4 1966171168
      %v735 = vunpack.c.0.s8 %v734
      %v736 = vlaneseq
      %v737 = vshrl.u32 %v736, 7
      %v738 = vsub.s32 %v735, %v737
      %v739 = vrot.slane %v731, %v738
      %v741 = vunpack.c.l.s4 1966171168
      %v742 = vunpack.c.0.s8 %v741
      %v743 = vlaneseq
      %v744 = vshrl.u32 %v743, 7
      %v745 = vsub.s32 %v742, %v744
      %v746 = vrot.slane %v732, %v745
      %v749 = vmul.f32 %v709, %v739
      %v750 = vmul.f32 %v709, %v746
      %752 = vset.pattern.permute.xlu0 0
      %753 = vperm.xlu0 %752, %v655
      %v754 = vpop.permute.xlu0 %753
      %v756 = vadd.f32 %v754, %v749
      %v757 = vadd.f32 %v754, %v750
      %s758 = scalar_lea.vmem %s346, 1
      %v759 = vld [vmem:[%s758] ss:$8 sm:$0x3]
      %s760 = scalar_lea.vmem %s346, 33
      %v761 = vld [vmem:[%s760] ss:$8 sm:$0x3]
      %s762 = scalar_lea.vmem %s346, 65
      %v763 = vld [vmem:[%s762] ss:$8 sm:$0x3]
      %s764 = scalar_lea.vmem %s346, 97
      %v765 = vld [vmem:[%s764] ss:$8 sm:$0x3]
      %v766 = vlaneseq
      %v767 = vshrl.u32 %v766, 7
      %v768 = vsub.s32 1, %v767
      %v769 = vrot.slane %v650, %v768
      %v770 = vlaneseq
      %v771 = vshrl.u32 %v770, 7
      %v772 = vsub.s32 1, %v771
      %v773 = vrot.slane %v651, %v772
      %v776 = vcombine.low %v769, %v773
      %v778 = vunpack.c.l.s4 1966171168
      %v779 = vunpack.c.0.s8 %v778
      %v780 = vlaneseq
      %v781 = vshrl.u32 %v780, 7
      %v782 = vsub.s32 %v779, %v781
      %v783 = vrot.slane %v776, %v782
      %v784 = vcombine.high %v783, %v783
      %v786 = vunpack.c.l.s4 1966171168
      %v787 = vunpack.c.0.s8 %v786
      %v788 = vlaneseq
      %v789 = vshrl.u32 %v788, 7
      %v790 = vsub.s32 %v787, %v789
      %v791 = vrot.slane %v783, %v790
      %v793 = vunpack.c.l.s4 1966171168
      %v794 = vunpack.c.0.s8 %v793
      %v795 = vlaneseq
      %v796 = vshrl.u32 %v795, 7
      %v797 = vsub.s32 %v794, %v796
      %v798 = vrot.slane %v784, %v797
      %v799 = vcombine.high %v791, %v791
      %v800 = vcombine.high %v798, %v798
      %v805 = vmul.f32 %v759, %v791
      %v806 = vmul.f32 %v761, %v798
      %v807 = vmul.f32 %v763, %v799
      %v808 = vmul.f32 %v765, %v800
      %809 = vset.pattern.permute.xlu0 1
      %810 = vperm.xlu0 %809, %v654
      %v811 = vpop.permute.xlu0 %810
      %v817 = vcombine.low %v805, %v806
      %v818 = vcombine.low %v807, %v808
      %v820 = vunpack.c.l.s4 1966171168
      %v821 = vunpack.c.0.s8 %v820
      %v822 = vlaneseq
      %v823 = vshrl.u32 %v822, 7
      %v824 = vsub.s32 %v821, %v823
      %v825 = vrot.slane %v817, %v824
      %v827 = vunpack.c.l.s4 1966171168
      %v828 = vunpack.c.0.s8 %v827
      %v829 = vlaneseq
      %v830 = vshrl.u32 %v829, 7
      %v831 = vsub.s32 %v828, %v830
      %v832 = vrot.slane %v818, %v831
      %v833 = vcombine.low %v825, %v832
      %v834 = vcombine.high %v825, %v832
      %v836 = vunpack.c.l.s4 1966171168
      %v837 = vunpack.c.0.s8 %v836
      %v838 = vlaneseq
      %v839 = vshrl.u32 %v838, 7
      %v840 = vsub.s32 %v837, %v839
      %v841 = vrot.slane %v833, %v840
      %v843 = vunpack.c.l.s4 1966171168
      %v844 = vunpack.c.0.s8 %v843
      %v845 = vlaneseq
      %v846 = vshrl.u32 %v845, 7
      %v847 = vsub.s32 %v844, %v846
      %v848 = vrot.slane %v834, %v847
      %v851 = vmul.f32 %v811, %v841
      %v852 = vmul.f32 %v811, %v848
      %v853 = vadd.f32 %v756, %v851
      %v854 = vadd.f32 %v757, %v852
      %s855 = scalar_lea.vmem %s346, 2
      %v856 = vld [vmem:[%s855] ss:$8 sm:$0x3]
      %s857 = scalar_lea.vmem %s346, 34
      %v858 = vld [vmem:[%s857] ss:$8 sm:$0x3]
      %s859 = scalar_lea.vmem %s346, 66
      %v860 = vld [vmem:[%s859] ss:$8 sm:$0x3]
      %s861 = scalar_lea.vmem %s346, 98
      %v862 = vld [vmem:[%s861] ss:$8 sm:$0x3]
      %v863 = vlaneseq
      %v864 = vshrl.u32 %v863, 7
      %v865 = vsub.s32 2, %v864
      %v866 = vrot.slane %v650, %v865
      %v867 = vlaneseq
      %v868 = vshrl.u32 %v867, 7
      %v869 = vsub.s32 2, %v868
      %v870 = vrot.slane %v651, %v869
      %v873 = vcombine.low %v866, %v870
      %v875 = vunpack.c.l.s4 1966171168
      %v876 = vunpack.c.0.s8 %v875
      %v877 = vlaneseq
      %v878 = vshrl.u32 %v877, 7
      %v879 = vsub.s32 %v876, %v878
      %v880 = vrot.slane %v873, %v879
      %v881 = vcombine.high %v880, %v880
      %v883 = vunpack.c.l.s4 1966171168
      %v884 = vunpack.c.0.s8 %v883
      %v885 = vlaneseq
      %v886 = vshrl.u32 %v885, 7
      %v887 = vsub.s32 %v884, %v886
      %v888 = vrot.slane %v880, %v887
      %v890 = vunpack.c.l.s4 1966171168
      %v891 = vunpack.c.0.s8 %v890
      %v892 = vlaneseq
      %v893 = vshrl.u32 %v892, 7
      %v894 = vsub.s32 %v891, %v893
      %v895 = vrot.slane %v881, %v894
      %v896 = vcombine.high %v888, %v888
      %v897 = vcombine.high %v895, %v895
      %v902 = vmul.f32 %v856, %v888
      %v903 = vmul.f32 %v858, %v895
      %v904 = vmul.f32 %v860, %v896
      %v905 = vmul.f32 %v862, %v897
      %906 = vset.pattern.permute.xlu0 2
      %907 = vperm.xlu0 %906, %v654
      %v908 = vpop.permute.xlu0 %907
      %v914 = vcombine.low %v902, %v903
      %v915 = vcombine.low %v904, %v905
      %v917 = vunpack.c.l.s4 1966171168
      %v918 = vunpack.c.0.s8 %v917
      %v919 = vlaneseq
      %v920 = vshrl.u32 %v919, 7
      %v921 = vsub.s32 %v918, %v920
      %v922 = vrot.slane %v914, %v921
      %v924 = vunpack.c.l.s4 1966171168
      %v925 = vunpack.c.0.s8 %v924
      %v926 = vlaneseq
      %v927 = vshrl.u32 %v926, 7
      %v928 = vsub.s32 %v925, %v927
      %v929 = vrot.slane %v915, %v928
      %v930 = vcombine.low %v922, %v929
      %v931 = vcombine.high %v922, %v929
      %v933 = vunpack.c.l.s4 1966171168
      %v934 = vunpack.c.0.s8 %v933
      %v935 = vlaneseq
      %v936 = vshrl.u32 %v935, 7
      %v937 = vsub.s32 %v934, %v936
      %v938 = vrot.slane %v930, %v937
      %v940 = vunpack.c.l.s4 1966171168
      %v941 = vunpack.c.0.s8 %v940
      %v942 = vlaneseq
      %v943 = vshrl.u32 %v942, 7
      %v944 = vsub.s32 %v941, %v943
      %v945 = vrot.slane %v931, %v944
      %v948 = vmul.f32 %v908, %v938
      %v949 = vmul.f32 %v908, %v945
      %v950 = vadd.f32 %v853, %v948
      %v951 = vadd.f32 %v854, %v949
      %s952 = scalar_lea.vmem %s346, 3
      %v953 = vld [vmem:[%s952] ss:$8 sm:$0x3]
      %s954 = scalar_lea.vmem %s346, 35
      %v955 = vld [vmem:[%s954] ss:$8 sm:$0x3]
      %s956 = scalar_lea.vmem %s346, 67
      %v957 = vld [vmem:[%s956] ss:$8 sm:$0x3]
      %s958 = scalar_lea.vmem %s346, 99
      %v959 = vld [vmem:[%s958] ss:$8 sm:$0x3]
      %v960 = vlaneseq
      %v961 = vshrl.u32 %v960, 7
      %v962 = vsub.s32 3, %v961
      %v963 = vrot.slane %v650, %v962
      %v964 = vlaneseq
      %v965 = vshrl.u32 %v964, 7
      %v966 = vsub.s32 3, %v965
      %v967 = vrot.slane %v651, %v966
      %v970 = vcombine.low %v963, %v967
      %v972 = vunpack.c.l.s4 1966171168
      %v973 = vunpack.c.0.s8 %v972
      %v974 = vlaneseq
      %v975 = vshrl.u32 %v974, 7
      %v976 = vsub.s32 %v973, %v975
      %v977 = vrot.slane %v970, %v976
      %v978 = vcombine.high %v977, %v977
      %v980 = vunpack.c.l.s4 1966171168
      %v981 = vunpack.c.0.s8 %v980
      %v982 = vlaneseq
      %v983 = vshrl.u32 %v982, 7
      %v984 = vsub.s32 %v981, %v983
      %v985 = vrot.slane %v977, %v984
      %v987 = vunpack.c.l.s4 1966171168
      %v988 = vunpack.c.0.s8 %v987
      %v989 = vlaneseq
      %v990 = vshrl.u32 %v989, 7
      %v991 = vsub.s32 %v988, %v990
      %v992 = vrot.slane %v978, %v991
      %v993 = vcombine.high %v985, %v985
      %v994 = vcombine.high %v992, %v992
      %v999 = vmul.f32 %v953, %v985
      %v1000 = vmul.f32 %v955, %v992
      %v1001 = vmul.f32 %v957, %v993
      %v1002 = vmul.f32 %v959, %v994
      %1003 = vset.pattern.permute.xlu0 3
      %1004 = vperm.xlu0 %1003, %v654
      %v1005 = vpop.permute.xlu0 %1004
      %v1011 = vcombine.low %v999, %v1000
      %v1012 = vcombine.low %v1001, %v1002
      %v1014 = vunpack.c.l.s4 1966171168
      %v1015 = vunpack.c.0.s8 %v1014
      %v1016 = vlaneseq
      %v1017 = vshrl.u32 %v1016, 7
      %v1018 = vsub.s32 %v1015, %v1017
      %v1019 = vrot.slane %v1011, %v1018
      %v1021 = vunpack.c.l.s4 1966171168
      %v1022 = vunpack.c.0.s8 %v1021
      %v1023 = vlaneseq
      %v1024 = vshrl.u32 %v1023, 7
      %v1025 = vsub.s32 %v1022, %v1024
      %v1026 = vrot.slane %v1012, %v1025
      %v1027 = vcombine.low %v1019, %v1026
      %v1028 = vcombine.high %v1019, %v1026
      %v1030 = vunpack.c.l.s4 1966171168
      %v1031 = vunpack.c.0.s8 %v1030
      %v1032 = vlaneseq
      %v1033 = vshrl.u32 %v1032, 7
      %v1034 = vsub.s32 %v1031, %v1033
      %v1035 = vrot.slane %v1027, %v1034
      %v1037 = vunpack.c.l.s4 1966171168
      %v1038 = vunpack.c.0.s8 %v1037
      %v1039 = vlaneseq
      %v1040 = vshrl.u32 %v1039, 7
      %v1041 = vsub.s32 %v1038, %v1040
      %v1042 = vrot.slane %v1028, %v1041
      %v1045 = vmul.f32 %v1005, %v1035
      %v1046 = vmul.f32 %v1005, %v1042
      %v1047 = vadd.f32 %v950, %v1045
      %v1048 = vadd.f32 %v951, %v1046
      %s1049 = scalar_lea.vmem %s346, 4
      %v1050 = vld [vmem:[%s1049] ss:$8 sm:$0x3]
      %s1051 = scalar_lea.vmem %s346, 36
      %v1052 = vld [vmem:[%s1051] ss:$8 sm:$0x3]
      %s1053 = scalar_lea.vmem %s346, 68
      %v1054 = vld [vmem:[%s1053] ss:$8 sm:$0x3]
      %s1055 = scalar_lea.vmem %s346, 100
      %v1056 = vld [vmem:[%s1055] ss:$8 sm:$0x3]
      %v1057 = vlaneseq
      %v1058 = vshrl.u32 %v1057, 7
      %v1059 = vsub.s32 4, %v1058
      %v1060 = vrot.slane %v650, %v1059
      %v1061 = vlaneseq
      %v1062 = vshrl.u32 %v1061, 7
      %v1063 = vsub.s32 4, %v1062
      %v1064 = vrot.slane %v651, %v1063
      %v1067 = vcombine.low %v1060, %v1064
      %v1069 = vunpack.c.l.s4 1966171168
      %v1070 = vunpack.c.0.s8 %v1069
      %v1071 = vlaneseq
      %v1072 = vshrl.u32 %v1071, 7
      %v1073 = vsub.s32 %v1070, %v1072
      %v1074 = vrot.slane %v1067, %v1073
      %v1075 = vcombine.high %v1074, %v1074
      %v1077 = vunpack.c.l.s4 1966171168
      %v1078 = vunpack.c.0.s8 %v1077
      %v1079 = vlaneseq
      %v1080 = vshrl.u32 %v1079, 7
      %v1081 = vsub.s32 %v1078, %v1080
      %v1082 = vrot.slane %v1074, %v1081
      %v1084 = vunpack.c.l.s4 1966171168
      %v1085 = vunpack.c.0.s8 %v1084
      %v1086 = vlaneseq
      %v1087 = vshrl.u32 %v1086, 7
      %v1088 = vsub.s32 %v1085, %v1087
      %v1089 = vrot.slane %v1075, %v1088
      %v1090 = vcombine.high %v1082, %v1082
      %v1091 = vcombine.high %v1089, %v1089
      %v1096 = vmul.f32 %v1050, %v1082
      %v1097 = vmul.f32 %v1052, %v1089
      %v1098 = vmul.f32 %v1054, %v1090
      %v1099 = vmul.f32 %v1056, %v1091
      %1100 = vset.pattern.permute.xlu0 4
      %1101 = vperm.xlu0 %1100, %v654
      %v1102 = vpop.permute.xlu0 %1101
      %v1108 = vcombine.low %v1096, %v1097
      %v1109 = vcombine.low %v1098, %v1099
      %v1111 = vunpack.c.l.s4 1966171168
      %v1112 = vunpack.c.0.s8 %v1111
      %v1113 = vlaneseq
      %v1114 = vshrl.u32 %v1113, 7
      %v1115 = vsub.s32 %v1112, %v1114
      %v1116 = vrot.slane %v1108, %v1115
      %v1118 = vunpack.c.l.s4 1966171168
      %v1119 = vunpack.c.0.s8 %v1118
      %v1120 = vlaneseq
      %v1121 = vshrl.u32 %v1120, 7
      %v1122 = vsub.s32 %v1119, %v1121
      %v1123 = vrot.slane %v1109, %v1122
      %v1124 = vcombine.low %v1116, %v1123
      %v1125 = vcombine.high %v1116, %v1123
      %v1127 = vunpack.c.l.s4 1966171168
      %v1128 = vunpack.c.0.s8 %v1127
      %v1129 = vlaneseq
      %v1130 = vshrl.u32 %v1129, 7
      %v1131 = vsub.s32 %v1128, %v1130
      %v1132 = vrot.slane %v1124, %v1131
      %v1134 = vunpack.c.l.s4 1966171168
      %v1135 = vunpack.c.0.s8 %v1134
      %v1136 = vlaneseq
      %v1137 = vshrl.u32 %v1136, 7
      %v1138 = vsub.s32 %v1135, %v1137
      %v1139 = vrot.slane %v1125, %v1138
      %v1142 = vmul.f32 %v1102, %v1132
      %v1143 = vmul.f32 %v1102, %v1139
      %v1144 = vadd.f32 %v1047, %v1142
      %v1145 = vadd.f32 %v1048, %v1143
      %s1146 = scalar_lea.vmem %s346, 5
      %v1147 = vld [vmem:[%s1146] ss:$8 sm:$0x3]
      %s1148 = scalar_lea.vmem %s346, 37
      %v1149 = vld [vmem:[%s1148] ss:$8 sm:$0x3]
      %s1150 = scalar_lea.vmem %s346, 69
      %v1151 = vld [vmem:[%s1150] ss:$8 sm:$0x3]
      %s1152 = scalar_lea.vmem %s346, 101
      %v1153 = vld [vmem:[%s1152] ss:$8 sm:$0x3]
      %v1154 = vlaneseq
      %v1155 = vshrl.u32 %v1154, 7
      %v1156 = vsub.s32 5, %v1155
      %v1157 = vrot.slane %v650, %v1156
      %v1158 = vlaneseq
      %v1159 = vshrl.u32 %v1158, 7
      %v1160 = vsub.s32 5, %v1159
      %v1161 = vrot.slane %v651, %v1160
      %v1164 = vcombine.low %v1157, %v1161
      %v1166 = vunpack.c.l.s4 1966171168
      %v1167 = vunpack.c.0.s8 %v1166
      %v1168 = vlaneseq
      %v1169 = vshrl.u32 %v1168, 7
      %v1170 = vsub.s32 %v1167, %v1169
      %v1171 = vrot.slane %v1164, %v1170
      %v1172 = vcombine.high %v1171, %v1171
      %v1174 = vunpack.c.l.s4 1966171168
      %v1175 = vunpack.c.0.s8 %v1174
      %v1176 = vlaneseq
      %v1177 = vshrl.u32 %v1176, 7
      %v1178 = vsub.s32 %v1175, %v1177
      %v1179 = vrot.slane %v1171, %v1178
      %v1181 = vunpack.c.l.s4 1966171168
      %v1182 = vunpack.c.0.s8 %v1181
      %v1183 = vlaneseq
      %v1184 = vshrl.u32 %v1183, 7
      %v1185 = vsub.s32 %v1182, %v1184
      %v1186 = vrot.slane %v1172, %v1185
      %v1187 = vcombine.high %v1179, %v1179
      %v1188 = vcombine.high %v1186, %v1186
      %v1193 = vmul.f32 %v1147, %v1179
      %v1194 = vmul.f32 %v1149, %v1186
      %v1195 = vmul.f32 %v1151, %v1187
      %v1196 = vmul.f32 %v1153, %v1188
      %1197 = vset.pattern.permute.xlu0 5
      %1198 = vperm.xlu0 %1197, %v654
      %v1199 = vpop.permute.xlu0 %1198
      %v1205 = vcombine.low %v1193, %v1194
      %v1206 = vcombine.low %v1195, %v1196
      %v1208 = vunpack.c.l.s4 1966171168
      %v1209 = vunpack.c.0.s8 %v1208
      %v1210 = vlaneseq
      %v1211 = vshrl.u32 %v1210, 7
      %v1212 = vsub.s32 %v1209, %v1211
      %v1213 = vrot.slane %v1205, %v1212
      %v1215 = vunpack.c.l.s4 1966171168
      %v1216 = vunpack.c.0.s8 %v1215
      %v1217 = vlaneseq
      %v1218 = vshrl.u32 %v1217, 7
      %v1219 = vsub.s32 %v1216, %v1218
      %v1220 = vrot.slane %v1206, %v1219
      %v1221 = vcombine.low %v1213, %v1220
      %v1222 = vcombine.high %v1213, %v1220
      %v1224 = vunpack.c.l.s4 1966171168
      %v1225 = vunpack.c.0.s8 %v1224
      %v1226 = vlaneseq
      %v1227 = vshrl.u32 %v1226, 7
      %v1228 = vsub.s32 %v1225, %v1227
      %v1229 = vrot.slane %v1221, %v1228
      %v1231 = vunpack.c.l.s4 1966171168
      %v1232 = vunpack.c.0.s8 %v1231
      %v1233 = vlaneseq
      %v1234 = vshrl.u32 %v1233, 7
      %v1235 = vsub.s32 %v1232, %v1234
      %v1236 = vrot.slane %v1222, %v1235
      %v1239 = vmul.f32 %v1199, %v1229
      %v1240 = vmul.f32 %v1199, %v1236
      %v1241 = vadd.f32 %v1144, %v1239
      %v1242 = vadd.f32 %v1145, %v1240
      %s1243 = scalar_lea.vmem %s346, 6
      %v1244 = vld [vmem:[%s1243] ss:$8 sm:$0x3]
      %s1245 = scalar_lea.vmem %s346, 38
      %v1246 = vld [vmem:[%s1245] ss:$8 sm:$0x3]
      %s1247 = scalar_lea.vmem %s346, 70
      %v1248 = vld [vmem:[%s1247] ss:$8 sm:$0x3]
      %s1249 = scalar_lea.vmem %s346, 102
      %v1250 = vld [vmem:[%s1249] ss:$8 sm:$0x3]
      %v1251 = vlaneseq
      %v1252 = vshrl.u32 %v1251, 7
      %v1253 = vsub.s32 6, %v1252
      %v1254 = vrot.slane %v650, %v1253
      %v1255 = vlaneseq
      %v1256 = vshrl.u32 %v1255, 7
      %v1257 = vsub.s32 6, %v1256
      %v1258 = vrot.slane %v651, %v1257
      %v1261 = vcombine.low %v1254, %v1258
      %v1263 = vunpack.c.l.s4 1966171168
      %v1264 = vunpack.c.0.s8 %v1263
      %v1265 = vlaneseq
      %v1266 = vshrl.u32 %v1265, 7
      %v1267 = vsub.s32 %v1264, %v1266
      %v1268 = vrot.slane %v1261, %v1267
      %v1269 = vcombine.high %v1268, %v1268
      %v1271 = vunpack.c.l.s4 1966171168
      %v1272 = vunpack.c.0.s8 %v1271
      %v1273 = vlaneseq
      %v1274 = vshrl.u32 %v1273, 7
      %v1275 = vsub.s32 %v1272, %v1274
      %v1276 = vrot.slane %v1268, %v1275
      %v1278 = vunpack.c.l.s4 1966171168
      %v1279 = vunpack.c.0.s8 %v1278
      %v1280 = vlaneseq
      %v1281 = vshrl.u32 %v1280, 7
      %v1282 = vsub.s32 %v1279, %v1281
      %v1283 = vrot.slane %v1269, %v1282
      %v1284 = vcombine.high %v1276, %v1276
      %v1285 = vcombine.high %v1283, %v1283
      %v1290 = vmul.f32 %v1244, %v1276
      %v1291 = vmul.f32 %v1246, %v1283
      %v1292 = vmul.f32 %v1248, %v1284
      %v1293 = vmul.f32 %v1250, %v1285
      %1294 = vset.pattern.permute.xlu0 6
      %1295 = vperm.xlu0 %1294, %v654
      %v1296 = vpop.permute.xlu0 %1295
      %v1302 = vcombine.low %v1290, %v1291
      %v1303 = vcombine.low %v1292, %v1293
      %v1305 = vunpack.c.l.s4 1966171168
      %v1306 = vunpack.c.0.s8 %v1305
      %v1307 = vlaneseq
      %v1308 = vshrl.u32 %v1307, 7
      %v1309 = vsub.s32 %v1306, %v1308
      %v1310 = vrot.slane %v1302, %v1309
      %v1312 = vunpack.c.l.s4 1966171168
      %v1313 = vunpack.c.0.s8 %v1312
      %v1314 = vlaneseq
      %v1315 = vshrl.u32 %v1314, 7
      %v1316 = vsub.s32 %v1313, %v1315
      %v1317 = vrot.slane %v1303, %v1316
      %v1318 = vcombine.low %v1310, %v1317
      %v1319 = vcombine.high %v1310, %v1317
      %v1321 = vunpack.c.l.s4 1966171168
      %v1322 = vunpack.c.0.s8 %v1321
      %v1323 = vlaneseq
      %v1324 = vshrl.u32 %v1323, 7
      %v1325 = vsub.s32 %v1322, %v1324
      %v1326 = vrot.slane %v1318, %v1325
      %v1328 = vunpack.c.l.s4 1966171168
      %v1329 = vunpack.c.0.s8 %v1328
      %v1330 = vlaneseq
      %v1331 = vshrl.u32 %v1330, 7
      %v1332 = vsub.s32 %v1329, %v1331
      %v1333 = vrot.slane %v1319, %v1332
      %v1336 = vmul.f32 %v1296, %v1326
      %v1337 = vmul.f32 %v1296, %v1333
      %v1338 = vadd.f32 %v1241, %v1336
      %v1339 = vadd.f32 %v1242, %v1337
      %s1340 = scalar_lea.vmem %s346, 7
      %v1341 = vld [vmem:[%s1340] ss:$8 sm:$0x3]
      %s1342 = scalar_lea.vmem %s346, 39
      %v1343 = vld [vmem:[%s1342] ss:$8 sm:$0x3]
      %s1344 = scalar_lea.vmem %s346, 71
      %v1345 = vld [vmem:[%s1344] ss:$8 sm:$0x3]
      %s1346 = scalar_lea.vmem %s346, 103
      %v1347 = vld [vmem:[%s1346] ss:$8 sm:$0x3]
      %v1348 = vlaneseq
      %v1349 = vshrl.u32 %v1348, 7
      %v1350 = vsub.s32 7, %v1349
      %v1351 = vrot.slane %v650, %v1350
      %v1352 = vlaneseq
      %v1353 = vshrl.u32 %v1352, 7
      %v1354 = vsub.s32 7, %v1353
      %v1355 = vrot.slane %v651, %v1354
      %v1358 = vcombine.low %v1351, %v1355
      %v1360 = vunpack.c.l.s4 1966171168
      %v1361 = vunpack.c.0.s8 %v1360
      %v1362 = vlaneseq
      %v1363 = vshrl.u32 %v1362, 7
      %v1364 = vsub.s32 %v1361, %v1363
      %v1365 = vrot.slane %v1358, %v1364
      %v1366 = vcombine.high %v1365, %v1365
      %v1368 = vunpack.c.l.s4 1966171168
      %v1369 = vunpack.c.0.s8 %v1368
      %v1370 = vlaneseq
      %v1371 = vshrl.u32 %v1370, 7
      %v1372 = vsub.s32 %v1369, %v1371
      %v1373 = vrot.slane %v1365, %v1372
      %v1375 = vunpack.c.l.s4 1966171168
      %v1376 = vunpack.c.0.s8 %v1375
      %v1377 = vlaneseq
      %v1378 = vshrl.u32 %v1377, 7
      %v1379 = vsub.s32 %v1376, %v1378
      %v1380 = vrot.slane %v1366, %v1379
      %v1381 = vcombine.high %v1373, %v1373
      %v1382 = vcombine.high %v1380, %v1380
      %v1387 = vmul.f32 %v1341, %v1373
      %v1388 = vmul.f32 %v1343, %v1380
      %v1389 = vmul.f32 %v1345, %v1381
      %v1390 = vmul.f32 %v1347, %v1382
      %1391 = vset.pattern.permute.xlu0 7
      %1392 = vperm.xlu0 %1391, %v654
      %v1393 = vpop.permute.xlu0 %1392
      %v1399 = vcombine.low %v1387, %v1388
      %v1400 = vcombine.low %v1389, %v1390
      %v1402 = vunpack.c.l.s4 1966171168
      %v1403 = vunpack.c.0.s8 %v1402
      %v1404 = vlaneseq
      %v1405 = vshrl.u32 %v1404, 7
      %v1406 = vsub.s32 %v1403, %v1405
      %v1407 = vrot.slane %v1399, %v1406
      %v1409 = vunpack.c.l.s4 1966171168
      %v1410 = vunpack.c.0.s8 %v1409
      %v1411 = vlaneseq
      %v1412 = vshrl.u32 %v1411, 7
      %v1413 = vsub.s32 %v1410, %v1412
      %v1414 = vrot.slane %v1400, %v1413
      %v1415 = vcombine.low %v1407, %v1414
      %v1416 = vcombine.high %v1407, %v1414
      %v1418 = vunpack.c.l.s4 1966171168
      %v1419 = vunpack.c.0.s8 %v1418
      %v1420 = vlaneseq
      %v1421 = vshrl.u32 %v1420, 7
      %v1422 = vsub.s32 %v1419, %v1421
      %v1423 = vrot.slane %v1415, %v1422
      %v1425 = vunpack.c.l.s4 1966171168
      %v1426 = vunpack.c.0.s8 %v1425
      %v1427 = vlaneseq
      %v1428 = vshrl.u32 %v1427, 7
      %v1429 = vsub.s32 %v1426, %v1428
      %v1430 = vrot.slane %v1416, %v1429
      %v1433 = vmul.f32 %v1393, %v1423
      %v1434 = vmul.f32 %v1393, %v1430
      %v1435 = vadd.f32 %v1338, %v1433
      %v1436 = vadd.f32 %v1339, %v1434
      %s1437 = scalar_lea.vmem %s346, 16
      %v1438 = vld [vmem:[%s1437] ss:$8 sm:$0x3]
      %s1439 = scalar_lea.vmem %s346, 48
      %v1440 = vld [vmem:[%s1439] ss:$8 sm:$0x3]
      %s1441 = scalar_lea.vmem %s346, 80
      %v1442 = vld [vmem:[%s1441] ss:$8 sm:$0x3]
      %s1443 = scalar_lea.vmem %s346, 112
      %v1444 = vld [vmem:[%s1443] ss:$8 sm:$0x3]
      %v1445 = vlaneseq
      %v1446 = vshrl.u32 %v1445, 7
      %v1447 = vsub.s32 0, %v1446
      %v1448 = vrot.slane %v652, %v1447
      %v1449 = vlaneseq
      %v1450 = vshrl.u32 %v1449, 7
      %v1451 = vsub.s32 0, %v1450
      %v1452 = vrot.slane %v653, %v1451
      %v1455 = vcombine.low %v1448, %v1452
      %v1457 = vunpack.c.l.s4 1966171168
      %v1458 = vunpack.c.0.s8 %v1457
      %v1459 = vlaneseq
      %v1460 = vshrl.u32 %v1459, 7
      %v1461 = vsub.s32 %v1458, %v1460
      %v1462 = vrot.slane %v1455, %v1461
      %v1463 = vcombine.high %v1462, %v1462
      %v1465 = vunpack.c.l.s4 1966171168
      %v1466 = vunpack.c.0.s8 %v1465
      %v1467 = vlaneseq
      %v1468 = vshrl.u32 %v1467, 7
      %v1469 = vsub.s32 %v1466, %v1468
      %v1470 = vrot.slane %v1462, %v1469
      %v1472 = vunpack.c.l.s4 1966171168
      %v1473 = vunpack.c.0.s8 %v1472
      %v1474 = vlaneseq
      %v1475 = vshrl.u32 %v1474, 7
      %v1476 = vsub.s32 %v1473, %v1475
      %v1477 = vrot.slane %v1463, %v1476
      %v1478 = vcombine.high %v1470, %v1470
      %v1479 = vcombine.high %v1477, %v1477
      %v1484 = vmul.f32 %v1438, %v1470
      %v1485 = vmul.f32 %v1440, %v1477
      %v1486 = vmul.f32 %v1442, %v1478
      %v1487 = vmul.f32 %v1444, %v1479
      %1488 = vset.pattern.permute.xlu0 8
      %1489 = vperm.xlu0 %1488, %v654
      %v1490 = vpop.permute.xlu0 %1489
      %v1496 = vcombine.low %v1484, %v1485
      %v1497 = vcombine.low %v1486, %v1487
      %v1499 = vunpack.c.l.s4 1966171168
      %v1500 = vunpack.c.0.s8 %v1499
      %v1501 = vlaneseq
      %v1502 = vshrl.u32 %v1501, 7
      %v1503 = vsub.s32 %v1500, %v1502
      %v1504 = vrot.slane %v1496, %v1503
      %v1506 = vunpack.c.l.s4 1966171168
      %v1507 = vunpack.c.0.s8 %v1506
      %v1508 = vlaneseq
      %v1509 = vshrl.u32 %v1508, 7
      %v1510 = vsub.s32 %v1507, %v1509
      %v1511 = vrot.slane %v1497, %v1510
      %v1512 = vcombine.low %v1504, %v1511
      %v1513 = vcombine.high %v1504, %v1511
      %v1515 = vunpack.c.l.s4 1966171168
      %v1516 = vunpack.c.0.s8 %v1515
      %v1517 = vlaneseq
      %v1518 = vshrl.u32 %v1517, 7
      %v1519 = vsub.s32 %v1516, %v1518
      %v1520 = vrot.slane %v1512, %v1519
      %v1522 = vunpack.c.l.s4 1966171168
      %v1523 = vunpack.c.0.s8 %v1522
      %v1524 = vlaneseq
      %v1525 = vshrl.u32 %v1524, 7
      %v1526 = vsub.s32 %v1523, %v1525
      %v1527 = vrot.slane %v1513, %v1526
      %v1530 = vmul.f32 %v1490, %v1520
      %v1531 = vmul.f32 %v1490, %v1527
      %v1532 = vadd.f32 %v1435, %v1530
      %v1533 = vadd.f32 %v1436, %v1531
      %v1536 = vcombine.low %v1532, %v1533
      %1538 = vst [vmem:[%s356] sm:$0xff] %v1536
      %p1539 = scmp.eq.s32.totalorder %s25, 0
      // Predicated region
      $region45: #{encoder_v2_forward.2} parent=43 // pred_check
        %p1540 = pneg %p1539
      $region46: #{encoder_v2_forward.2} parent=43 // pred_check_branch
        %1542 = sbr.rel (%p1540) target = $region48
      $region47: #{encoder_v2_forward.2} parent=43 // pred_region
        %vm1543 = vcmask 3072
        %1544 = vst.msk [vmem:[%s361] sm:$0xf] %vm1543, 0.0
        %1545 = vst.msk [vmem:[%s365] sm:$0xf] %vm1543, 0.0
      $region48: #{encoder_v2_forward.2} parent=43 // pred_fallthru
        _
      %v1546 = vlaneseq
      %v1547 = vand.u32 %v1546, 127
      %v1548 = vadd.s32 %v1547, 128
      %s1549 = smul.u32 %s25, 256
      %v1550 = vstv %s1549
      %v1551 = vadd.s32 %v1547, %v1550
      %v1552 = vadd.s32 %v1548, %v1550
      %vm1553 = vcmp.lt.s32.totalorder %v1551, 160
      %vm1554 = vcmp.lt.s32.totalorder %v1552, 160
      %v1555 = vsel %vm1553, %v1532, 0.0
      %v1556 = vsel %vm1554, %v1533, 0.0
      %v1557 = vld [vmem:[%s361] sm:$0xf]
      %vm1558 = vcmask 1043456
      %v1559 = vsel %vm1558, %v1555, 0.0
      %v1560 = vsel %vm1558, %v1556, 0.0
      %v1561 = vadd.f32 %v1559, %v1560
      %1562 = vadd.xlane.f32.xlu0 %v1561
      %v1563 = vpop.xlane.xlu0 %1562
      %v1564 = vadd.f32 %v1557, %v1563
      %vm1565 = vcmask 3072
      %1566 = vst.msk [vmem:[%s361] sm:$0xf] %vm1565, %v1564
      %v1567 = vld [vmem:[%s365] sm:$0xf]
      %v1568 = vmul.f32 %v1555, %v1532
      %v1569 = vmul.f32 %v1556, %v1533
      %v1570 = vsel %vm1558, %v1568, 0.0
      %v1571 = vsel %vm1558, %v1569, 0.0
      %v1572 = vadd.f32 %v1570, %v1571
      %1573 = vadd.xlane.f32.xlu0 %v1572
      %v1574 = vpop.xlane.xlu0 %1573
      %v1575 = vadd.f32 %v1567, %v1574
      %1576 = vst.msk [vmem:[%s365] sm:$0xf] %vm1565, %v1575
      %s1577 = smul.u32 2, %s25
      %p1578 = scmp.lt.s32.totalorder %s24, 1
      %s1579 = scalar_select %p1578, %s24, 1
      %p1580 = scmp.lt.s32.totalorder %s1577, 1
      %s1581 = scalar_select %p1580, %s1577, 1
      %s1582 = smul.addr %s1579, 2
      %s1583 = sadd.s32 %s1581, %s1582
      %s1584 = smul.addr %s1583, 4
      %s1585 = scalar_lea.vmem %s6, %s1584
      %p1586 = scmp.lt.s32.totalorder %s24, 1
      %s1587 = scalar_select %p1586, %s24, 1
      %s1588 = smul.addr %s1587, 4
      %s1589 = scalar_lea.vmem %s7, %s1588
      %p1590 = scmp.lt.s32.totalorder %s24, 1
      %s1591 = scalar_select %p1590, %s24, 1
      %s1592 = smul.addr %s1591, 4
      %s1593 = scalar_lea.vmem %s8, %s1592
      // Predicated region
      $region49: #{encoder_v2_forward.2} parent=43 // pred_check
        %p1594 = pneg %p185
      $region50: #{encoder_v2_forward.2} parent=43 // pred_check_branch
        %1596 = sbr.rel (%p1594) target = $region52
      $region51: #{encoder_v2_forward.2} parent=43 // pred_region
        %s1597 = smul.u32 2, %s25
      $region52: #{encoder_v2_forward.2} parent=43 // pred_fallthru
        _
      // Predicated region
      $region53: #{encoder_v2_forward.2} parent=43 // pred_check
        %p1598 = pneg %p211
      $region54: #{encoder_v2_forward.2} parent=43 // pred_check_branch
        %1600 = sbr.rel (%p1598) target = $region56
      $region55: #{encoder_v2_forward.2} parent=43 // pred_region
        _
      $region56: #{encoder_v2_forward.2} parent=43 // pred_fallthru
        _
      // Predicated region
      $region57: #{encoder_v2_forward.2} parent=43 // pred_check
        %p1601 = pneg %p237
      $region58: #{encoder_v2_forward.2} parent=43 // pred_check_branch
        %1603 = sbr.rel (%p1601) target = $region60
      $region59: #{encoder_v2_forward.2} parent=43 // pred_region
        _
      $region60: #{encoder_v2_forward.2} parent=43 // pred_fallthru
        _
    $region44: #{encoder_v2_forward.2} parent=5 // pred_fallthru
      _
    %p1604 = scmp.le.s32.totalorder 2, %s15
    // Predicated region
    $region61: #{encoder_v2_forward.2} parent=5 // pred_check
      %p1605 = pneg %p1604
    $region62: #{encoder_v2_forward.2} parent=5 // pred_check_branch
      %1607 = sbr.rel (%p1605) target = $region64
    $region63: #{encoder_v2_forward.2} parent=5 // pred_region
      %s1608 = ssub.s32 %s15, 2
      // Predicated region
      $region65: #{encoder_v2_forward.2} parent=63 // pred_check
        %p1609 = pneg %p191
      $region66: #{encoder_v2_forward.2} parent=63 // pred_check_branch
        %1611 = sbr.rel (%p1609) target = $region68
      $region67: #{encoder_v2_forward.2} parent=63 // pred_region
        %s1612 = smul.u32 2, %s27
        %p1613 = scmp.lt.s32.totalorder %s26, 1
        %s1614 = scalar_select %p1613, %s26, 1
        %p1615 = scmp.lt.s32.totalorder %s1612, 1
        %s1616 = scalar_select %p1615, %s1612, 1
        %s1617 = smul.addr %s1614, 2
        %s1618 = sadd.s32 %s1616, %s1617
        %s1619 = smul.addr %s1618, 4
        %s1620 = scalar_lea.vmem %s6, %s1619
      $region68: #{encoder_v2_forward.2} parent=63 // pred_fallthru
        _
      // Predicated region
      $region69: #{encoder_v2_forward.2} parent=63 // pred_check
        %p1621 = pneg %p217
      $region70: #{encoder_v2_forward.2} parent=63 // pred_check_branch
        %1623 = sbr.rel (%p1621) target = $region72
      $region71: #{encoder_v2_forward.2} parent=63 // pred_region
        %p1624 = scmp.lt.s32.totalorder %s26, 1
        %s1625 = scalar_select %p1624, %s26, 1
        %s1626 = smul.addr %s1625, 4
        %s1627 = scalar_lea.vmem %s7, %s1626
      $region72: #{encoder_v2_forward.2} parent=63 // pred_fallthru
        _
      // Predicated region
      $region73: #{encoder_v2_forward.2} parent=63 // pred_check
        %p1628 = pneg %p243
      $region74: #{encoder_v2_forward.2} parent=63 // pred_check_branch
        %1630 = sbr.rel (%p1628) target = $region76
      $region75: #{encoder_v2_forward.2} parent=63 // pred_region
        %p1631 = scmp.lt.s32.totalorder %s26, 1
        %s1632 = scalar_select %p1631, %s26, 1
        %s1633 = smul.addr %s1632, 4
        %s1634 = scalar_lea.vmem %s8, %s1633
      $region76: #{encoder_v2_forward.2} parent=63 // pred_fallthru
        _
    $region64: #{encoder_v2_forward.2} parent=5 // pred_fallthru
      _
  $region6: #{encoder_v2_forward.2} parent=0 // loop_footer
    %s19 = sadd.s32 1, %s15
  $region7: #{encoder_v2_forward.2} parent=0 // loop_footer_branch
    %14 = sbr.rel target = $region3
  $region8: #{encoder_v2_forward.2} parent=0 // loop_exit
    _

</llo_original>
